<compile_context>
chip_gen: v5e
topology: v5e:2x2
jax: 0.10.0
libtpu: 0.0.40
codegen_flags: <defaults>
</compile_context>

<pallas_src>
import functools

import jax
import jax.numpy as jnp
from jax.experimental import pallas as pl
from jax.experimental.pallas import tpu as pltpu

LANE = 128   # TPU lane width
SUB_V = 128  # vocab sub-block per inner step (counts stay at 16 vregs)


def baseline_kernel(idx_ref, scores_ref, b_ref, out_ref, *,
                    seq_len, tile_v, sub_v):
    # idx_ref:    [S, LANE]   int32 token ids for this batch tile (pad lanes = -1)
    # scores_ref: [1, tile_v] precomputed emb @ w for this vocab tile (lane-dense)
    # b_ref:      [1, 1]      fc bias (SMEM scalar)
    # out_ref:    [1, LANE]   accumulator across vocab tiles; final sigmoid probs
    k = pl.program_id(1)                     # vocab tile (reduction axis, innermost)

    @pl.when(k == 0)
    def _init():
        out_ref[...] = jnp.zeros_like(out_ref)

    lanes = out_ref.shape[1]
    n_sub = tile_v // sub_v
    static_seq = seq_len <= 64               # fully unroll short sequences

    if static_seq:
        idx = idx_ref[...]                   # [S, LANE], one VMEM load per grid step

    acc = jnp.zeros((1, lanes), jnp.float32)
    for j in range(n_sub):                   # static; n_sub is small (tile_v // 128)
        base = k * tile_v + j * sub_v
        gids = jax.lax.broadcasted_iota(jnp.int32, (sub_v, lanes), 0) + base
        zero_counts = jnp.zeros((sub_v, lanes), jnp.int32)

        # counts[v, b] = #{s : idx[s, b] == base + v}, accumulated in int32
        # (bool compares summed directly; single cast to f32 below).
        if static_seq:
            counts = zero_counts
            for s in range(seq_len):
                counts = counts + (idx[s:s + 1, :] == gids).astype(jnp.int32)
        else:
            def s_body(s, c):
                row = idx_ref[pl.ds(s, 1), :]             # [1, LANE] dynamic load
                return c + (row == gids).astype(jnp.int32)
            counts = jax.lax.fori_loop(0, seq_len, s_body, zero_counts, unroll=8)

        # counts-weighted sum of scores on the MXU: [1, sub_v] @ [sub_v, LANE]
        sc = scores_ref[:, j * sub_v:(j + 1) * sub_v]     # [1, sub_v]
        acc = acc + jnp.dot(sc, counts.astype(jnp.float32),
                            preferred_element_type=jnp.float32)

    out_ref[...] += acc                      # output block resident across k

    @pl.when(k == pl.num_programs(1) - 1)
    def _finalize():
        # apply 1/S after the reduction (exact counts), add bias, sigmoid
        out_ref[...] = jax.nn.sigmoid(out_ref[...] * (1.0 / seq_len) + b_ref[0, 0])


def baseline_forward(x, emb, w, b, *, tile_v=512, sub_v=SUB_V):
    """x: [S, B] int; emb: [V, D]; w: [D, 1]; b: [1, 1] -> [B] float32."""
    S, B = x.shape
    V, D = emb.shape
    assert tile_v % sub_v == 0
    # don't use a vocab tile larger than the (sub-block-rounded) vocab itself
    tile_v = min(tile_v, pl.cdiv(V, sub_v) * sub_v)

    B_pad = pl.cdiv(B, LANE) * LANE
    V_pad = pl.cdiv(V, tile_v) * tile_v

    # Batch-independent fused fc, hoisted out of the kernel:
    # scores[v] = emb[v, :] . w   (exact f32 multiply-add, one pass over emb)
    w_vec = jnp.asarray(w, jnp.float32).reshape(D)
    scores = jnp.sum(jnp.asarray(emb, jnp.float32) * w_vec[None, :], axis=1)   # [V]
    scores_p = jnp.zeros((1, V_pad), jnp.float32).at[0, :V].set(scores)        # lane-dense

    # pad batch lanes with -1 (matches no vocab id -> zero contribution)
    idx = jnp.full((S, B_pad), -1, dtype=jnp.int32)
    idx = idx.at[:, :B].set(x.astype(jnp.int32))

    b2 = jnp.asarray(b, jnp.float32).reshape(1, 1)

    nb = B_pad // LANE
    nv = V_pad // tile_v

    kernel = functools.partial(baseline_kernel, seq_len=S, tile_v=tile_v, sub_v=sub_v)

    grid_spec = pltpu.PrefetchScalarGridSpec(
        num_scalar_prefetch=0,
        grid=(nb, nv),                                            # vocab (reduction) last
        in_specs=[
            pl.BlockSpec((S, LANE), lambda bi, k: (0, bi)),       # token ids (B on lanes)
            pl.BlockSpec((1, tile_v), lambda bi, k: (0, k)),      # precomputed scores tile
            pl.BlockSpec((1, 1), lambda bi, k: (0, 0),
                         memory_space=pltpu.MemorySpace.SMEM),    # fc bias scalar
        ],
        out_specs=pl.BlockSpec((1, LANE), lambda bi, k: (0, bi)),
    )

    out = pl.pallas_call(
        kernel,
        grid_spec=grid_spec,
        out_shape=jax.ShapeDtypeStruct((1, B_pad), jnp.float32),
        compiler_params=pltpu.CompilerParams(
            dimension_semantics=("parallel", "arbitrary")),
    )(idx, scores_p, b2)

    return out[0, :B]     # squeeze(1) + drop lane padding


if __name__ == "__main__":
    SEQ, BATCH = 8, 4
    VOCAB, EMB_DIM = 1000, 64    # V_pad = 1024 -> 2 vocab tiles (exercises the reduction)

    key = jax.random.PRNGKey(0)
    k_idx, k_emb, k_w, k_b = jax.random.split(key, 4)

    # Deterministic synthetic "pretrained" embedding + fc params.
    x = jax.random.randint(k_idx, (SEQ, BATCH), 0, VOCAB, dtype=jnp.int32)
    emb = jax.random.normal(k_emb, (VOCAB, EMB_DIM), dtype=jnp.float32)
    w = (jax.random.normal(k_w, (EMB_DIM, 1), dtype=jnp.float32)
         / jnp.sqrt(EMB_DIM))
    b = jax.random.normal(k_b, (1, 1), dtype=jnp.float32) * 0.01

    out = baseline_forward(x, emb, w, b)
    out = jax.block_until_ready(out)

    # Pure-JAX reference of the PyTorch forward (exact f32 elementwise matvec).
    avg = emb[x].mean(axis=0)                                        # [B, D]
    ref = jax.nn.sigmoid(jnp.sum(avg * w[:, 0][None, :], axis=1) + b[0, 0])
    assert out.shape == (BATCH,)
    assert jnp.allclose(out, ref, atol=1e-4, rtol=1e-4), (out, ref)

    print("KERNEL_OK")
</pallas_src>

<mosaic_0001>
module attributes {stable_mosaic.version = 11 : i64} {
  func.func @baseline_kernel(%arg0: i32, %arg1: i32, %arg2: memref<8x128xi32, #tpu.memory_space<vmem>>, %arg3: memref<1x512xf32, #tpu.memory_space<vmem>>, %arg4: memref<1x1xf32, #tpu.memory_space<smem>>, %arg5: memref<1x128xf32, #tpu.memory_space<vmem>>) attributes {dimension_semantics = [#tpu.dimension_semantics<parallel>, #tpu.dimension_semantics<arbitrary>], iteration_bounds = array<i64: 1, 2>, scalar_prefetch = 0 : i64, scratch_operands = 0 : i64, tpu.core_type = #tpu.core_type<tc>, window_params = [{transform_indices = @transform_0, window_bounds = array<i64: 8, 128>}, {transform_indices = @transform_1, window_bounds = array<i64: 1, 512>}, {transform_indices = @transform_2, window_bounds = array<i64: 1, 1>}, {transform_indices = @transform_3, window_bounds = array<i64: 1, 128>}]} {
    %c0_i32 = arith.constant 0 : i32
    %0 = arith.cmpi eq, %arg1, %c0_i32 : i32
    %1 = arith.extui %0 : i1 to i32
    %c0_i32_0 = arith.constant 0 : i32
    %2 = arith.cmpi ne, %1, %c0_i32_0 : i32
    scf.if %2 {
      %cst_24 = arith.constant 0.000000e+00 : f32
      %211 = vector.broadcast %cst_24 : f32 to vector<1x128xf32>
      %c0_25 = arith.constant 0 : index
      %c0_26 = arith.constant 0 : index
      %212 = vector.load %arg5[%c0_25, %c0_26] : memref<1x128xf32, #tpu.memory_space<vmem>>, vector<1x128xf32>
      tpu.vector_store %arg5[%c0_25, %c0_26], %211 {strides = array<i32>} : memref<1x128xf32, #tpu.memory_space<vmem>>, vector<1x128xf32>,
    } else {
    }
    %c0 = arith.constant 0 : index
    %c0_1 = arith.constant 0 : index
    %3 = vector.load %arg2[%c0, %c0_1] : memref<8x128xi32, #tpu.memory_space<vmem>>, vector<8x128xi32>
    %cst = arith.constant 0.000000e+00 : f32
    %4 = vector.broadcast %cst : f32 to vector<1x128xf32>
    %c512_i32 = arith.constant 512 : i32
    %5 = arith.muli %arg1, %c512_i32 : i32
    %c0_i32_2 = arith.constant 0 : i32
    %6 = arith.addi %5, %c0_i32_2 : i32
    %7 = tpu.iota {dimensions = array<i32: 0>} : vector<128x128xi32>
    %8 = vector.broadcast %6 : i32 to vector<128x128xi32>
    %9 = arith.addi %7, %8 : vector<128x128xi32>
    %c0_i32_3 = arith.constant 0 : i32
    %10 = vector.broadcast %c0_i32_3 : i32 to vector<128x128xi32>
    %11 = vector.extract_strided_slice %3 {offsets = [0, 0], sizes = [1, 128], strides = [1, 1]} : vector<8x128xi32> to vector<1x128xi32>
    %12 = vector.broadcast %11 : vector<1x128xi32> to vector<128x128xi32>
    %13 = arith.cmpi eq, %12, %9 : vector<128x128xi32>
    %14 = arith.extui %13 : vector<128x128xi1> to vector<128x128xi32>
    %15 = arith.addi %10, %14 : vector<128x128xi32>
    %16 = vector.extract_strided_slice %3 {offsets = [1, 0], sizes = [1, 128], strides = [1, 1]} : vector<8x128xi32> to vector<1x128xi32>
    %17 = vector.broadcast %16 : vector<1x128xi32> to vector<128x128xi32>
    %18 = arith.cmpi eq, %17, %9 : vector<128x128xi32>
    %19 = arith.extui %18 : vector<128x128xi1> to vector<128x128xi32>
    %20 = arith.addi %15, %19 : vector<128x128xi32>
    %21 = vector.extract_strided_slice %3 {offsets = [2, 0], sizes = [1, 128], strides = [1, 1]} : vector<8x128xi32> to vector<1x128xi32>
    %22 = vector.broadcast %21 : vector<1x128xi32> to vector<128x128xi32>
    %23 = arith.cmpi eq, %22, %9 : vector<128x128xi32>
    %24 = arith.extui %23 : vector<128x128xi1> to vector<128x128xi32>
    %25 = arith.addi %20, %24 : vector<128x128xi32>
    %26 = vector.extract_strided_slice %3 {offsets = [3, 0], sizes = [1, 128], strides = [1, 1]} : vector<8x128xi32> to vector<1x128xi32>
    %27 = vector.broadcast %26 : vector<1x128xi32> to vector<128x128xi32>
    %28 = arith.cmpi eq, %27, %9 : vector<128x128xi32>
    %29 = arith.extui %28 : vector<128x128xi1> to vector<128x128xi32>
    %30 = arith.addi %25, %29 : vector<128x128xi32>
    %31 = vector.extract_strided_slice %3 {offsets = [4, 0], sizes = [1, 128], strides = [1, 1]} : vector<8x128xi32> to vector<1x128xi32>
    %32 = vector.broadcast %31 : vector<1x128xi32> to vector<128x128xi32>
    %33 = arith.cmpi eq, %32, %9 : vector<128x128xi32>
    %34 = arith.extui %33 : vector<128x128xi1> to vector<128x128xi32>
    %35 = arith.addi %30, %34 : vector<128x128xi32>
    %36 = vector.extract_strided_slice %3 {offsets = [5, 0], sizes = [1, 128], strides = [1, 1]} : vector<8x128xi32> to vector<1x128xi32>
    %37 = vector.broadcast %36 : vector<1x128xi32> to vector<128x128xi32>
    %38 = arith.cmpi eq, %37, %9 : vector<128x128xi32>
    %39 = arith.extui %38 : vector<128x128xi1> to vector<128x128xi32>
    %40 = arith.addi %35, %39 : vector<128x128xi32>
    %41 = vector.extract_strided_slice %3 {offsets = [6, 0], sizes = [1, 128], strides = [1, 1]} : vector<8x128xi32> to vector<1x128xi32>
    %42 = vector.broadcast %41 : vector<1x128xi32> to vector<128x128xi32>
    %43 = arith.cmpi eq, %42, %9 : vector<128x128xi32>
    %44 = arith.extui %43 : vector<128x128xi1> to vector<128x128xi32>
    %45 = arith.addi %40, %44 : vector<128x128xi32>
    %46 = vector.extract_strided_slice %3 {offsets = [7, 0], sizes = [1, 128], strides = [1, 1]} : vector<8x128xi32> to vector<1x128xi32>
    %47 = vector.broadcast %46 : vector<1x128xi32> to vector<128x128xi32>
    %48 = arith.cmpi eq, %47, %9 : vector<128x128xi32>
    %49 = arith.extui %48 : vector<128x128xi1> to vector<128x128xi32>
    %50 = arith.addi %45, %49 : vector<128x128xi32>
    %c0_4 = arith.constant 0 : index
    %c0_5 = arith.constant 0 : index
    %51 = vector.load %arg3[%c0_4, %c0_5] : memref<1x512xf32, #tpu.memory_space<vmem>>, vector<1x128xf32>
    %52 = arith.sitofp %50 : vector<128x128xi32> to vector<128x128xf32>
    %cst_6 = arith.constant dense<0.000000e+00> : vector<1x128xf32>
    %53 = tpu.matmul %51, %52, %cst_6 {dimension_numbers = #tpu.dot_dimension_numbers<[1], [0], [0], [1], [0, 0, 1, 1], [], []>} : vector<1x128xf32>, vector<128x128xf32>, vector<1x128xf32> -> vector<1x128xf32>
    %54 = arith.addf %4, %53 : vector<1x128xf32>
    %c512_i32_7 = arith.constant 512 : i32
    %55 = arith.muli %arg1, %c512_i32_7 : i32
    %c128_i32 = arith.constant 128 : i32
    %56 = arith.addi %55, %c128_i32 : i32
    %57 = tpu.iota {dimensions = array<i32: 0>} : vector<128x128xi32>
    %58 = vector.broadcast %56 : i32 to vector<128x128xi32>
    %59 = arith.addi %57, %58 : vector<128x128xi32>
    %c0_i32_8 = arith.constant 0 : i32
    %60 = vector.broadcast %c0_i32_8 : i32 to vector<128x128xi32>
    %61 = vector.extract_strided_slice %3 {offsets = [0, 0], sizes = [1, 128], strides = [1, 1]} : vector<8x128xi32> to vector<1x128xi32>
    %62 = vector.broadcast %61 : vector<1x128xi32> to vector<128x128xi32>
    %63 = arith.cmpi eq, %62, %59 : vector<128x128xi32>
    %64 = arith.extui %63 : vector<128x128xi1> to vector<128x128xi32>
    %65 = arith.addi %60, %64 : vector<128x128xi32>
    %66 = vector.extract_strided_slice %3 {offsets = [1, 0], sizes = [1, 128], strides = [1, 1]} : vector<8x128xi32> to vector<1x128xi32>
    %67 = vector.broadcast %66 : vector<1x128xi32> to vector<128x128xi32>
    %68 = arith.cmpi eq, %67, %59 : vector<128x128xi32>
    %69 = arith.extui %68 : vector<128x128xi1> to vector<128x128xi32>
    %70 = arith.addi %65, %69 : vector<128x128xi32>
    %71 = vector.extract_strided_slice %3 {offsets = [2, 0], sizes = [1, 128], strides = [1, 1]} : vector<8x128xi32> to vector<1x128xi32>
    %72 = vector.broadcast %71 : vector<1x128xi32> to vector<128x128xi32>
    %73 = arith.cmpi eq, %72, %59 : vector<128x128xi32>
    %74 = arith.extui %73 : vector<128x128xi1> to vector<128x128xi32>
    %75 = arith.addi %70, %74 : vector<128x128xi32>
    %76 = vector.extract_strided_slice %3 {offsets = [3, 0], sizes = [1, 128], strides = [1, 1]} : vector<8x128xi32> to vector<1x128xi32>
    %77 = vector.broadcast %76 : vector<1x128xi32> to vector<128x128xi32>
    %78 = arith.cmpi eq, %77, %59 : vector<128x128xi32>
    %79 = arith.extui %78 : vector<128x128xi1> to vector<128x128xi32>
    %80 = arith.addi %75, %79 : vector<128x128xi32>
    %81 = vector.extract_strided_slice %3 {offsets = [4, 0], sizes = [1, 128], strides = [1, 1]} : vector<8x128xi32> to vector<1x128xi32>
    %82 = vector.broadcast %81 : vector<1x128xi32> to vector<128x128xi32>
    %83 = arith.cmpi eq, %82, %59 : vector<128x128xi32>
    %84 = arith.extui %83 : vector<128x128xi1> to vector<128x128xi32>
    %85 = arith.addi %80, %84 : vector<128x128xi32>
    %86 = vector.extract_strided_slice %3 {offsets = [5, 0], sizes = [1, 128], strides = [1, 1]} : vector<8x128xi32> to vector<1x128xi32>
    %87 = vector.broadcast %86 : vector<1x128xi32> to vector<128x128xi32>
    %88 = arith.cmpi eq, %87, %59 : vector<128x128xi32>
    %89 = arith.extui %88 : vector<128x128xi1> to vector<128x128xi32>
    %90 = arith.addi %85, %89 : vector<128x128xi32>
    %91 = vector.extract_strided_slice %3 {offsets = [6, 0], sizes = [1, 128], strides = [1, 1]} : vector<8x128xi32> to vector<1x128xi32>
    %92 = vector.broadcast %91 : vector<1x128xi32> to vector<128x128xi32>
    %93 = arith.cmpi eq, %92, %59 : vector<128x128xi32>
    %94 = arith.extui %93 : vector<128x128xi1> to vector<128x128xi32>
    %95 = arith.addi %90, %94 : vector<128x128xi32>
    %96 = vector.extract_strided_slice %3 {offsets = [7, 0], sizes = [1, 128], strides = [1, 1]} : vector<8x128xi32> to vector<1x128xi32>
    %97 = vector.broadcast %96 : vector<1x128xi32> to vector<128x128xi32>
    %98 = arith.cmpi eq, %97, %59 : vector<128x128xi32>
    %99 = arith.extui %98 : vector<128x128xi1> to vector<128x128xi32>
    %100 = arith.addi %95, %99 : vector<128x128xi32>
    %c0_9 = arith.constant 0 : index
    %c128 = arith.constant 128 : index
    %101 = vector.load %arg3[%c0_9, %c128] : memref<1x512xf32, #tpu.memory_space<vmem>>, vector<1x128xf32>
    %102 = arith.sitofp %100 : vector<128x128xi32> to vector<128x128xf32>
    %cst_10 = arith.constant dense<0.000000e+00> : vector<1x128xf32>
    %103 = tpu.matmul %101, %102, %cst_10 {dimension_numbers = #tpu.dot_dimension_numbers<[1], [0], [0], [1], [0, 0, 1, 1], [], []>} : vector<1x128xf32>, vector<128x128xf32>, vector<1x128xf32> -> vector<1x128xf32>
    %104 = arith.addf %54, %103 : vector<1x128xf32>
    %c512_i32_11 = arith.constant 512 : i32
    %105 = arith.muli %arg1, %c512_i32_11 : i32
    %c256_i32 = arith.constant 256 : i32
    %106 = arith.addi %105, %c256_i32 : i32
    %107 = tpu.iota {dimensions = array<i32: 0>} : vector<128x128xi32>
    %108 = vector.broadcast %106 : i32 to vector<128x128xi32>
    %109 = arith.addi %107, %108 : vector<128x128xi32>
    %c0_i32_12 = arith.constant 0 : i32
    %110 = vector.broadcast %c0_i32_12 : i32 to vector<128x128xi32>
    %111 = vector.extract_strided_slice %3 {offsets = [0, 0], sizes = [1, 128], strides = [1, 1]} : vector<8x128xi32> to vector<1x128xi32>
    %112 = vector.broadcast %111 : vector<1x128xi32> to vector<128x128xi32>
    %113 = arith.cmpi eq, %112, %109 : vector<128x128xi32>
    %114 = arith.extui %113 : vector<128x128xi1> to vector<128x128xi32>
    %115 = arith.addi %110, %114 : vector<128x128xi32>
    %116 = vector.extract_strided_slice %3 {offsets = [1, 0], sizes = [1, 128], strides = [1, 1]} : vector<8x128xi32> to vector<1x128xi32>
    %117 = vector.broadcast %116 : vector<1x128xi32> to vector<128x128xi32>
    %118 = arith.cmpi eq, %117, %109 : vector<128x128xi32>
    %119 = arith.extui %118 : vector<128x128xi1> to vector<128x128xi32>
    %120 = arith.addi %115, %119 : vector<128x128xi32>
    %121 = vector.extract_strided_slice %3 {offsets = [2, 0], sizes = [1, 128], strides = [1, 1]} : vector<8x128xi32> to vector<1x128xi32>
    %122 = vector.broadcast %121 : vector<1x128xi32> to vector<128x128xi32>
    %123 = arith.cmpi eq, %122, %109 : vector<128x128xi32>
    %124 = arith.extui %123 : vector<128x128xi1> to vector<128x128xi32>
    %125 = arith.addi %120, %124 : vector<128x128xi32>
    %126 = vector.extract_strided_slice %3 {offsets = [3, 0], sizes = [1, 128], strides = [1, 1]} : vector<8x128xi32> to vector<1x128xi32>
    %127 = vector.broadcast %126 : vector<1x128xi32> to vector<128x128xi32>
    %128 = arith.cmpi eq, %127, %109 : vector<128x128xi32>
    %129 = arith.extui %128 : vector<128x128xi1> to vector<128x128xi32>
    %130 = arith.addi %125, %129 : vector<128x128xi32>
    %131 = vector.extract_strided_slice %3 {offsets = [4, 0], sizes = [1, 128], strides = [1, 1]} : vector<8x128xi32> to vector<1x128xi32>
    %132 = vector.broadcast %131 : vector<1x128xi32> to vector<128x128xi32>
    %133 = arith.cmpi eq, %132, %109 : vector<128x128xi32>
    %134 = arith.extui %133 : vector<128x128xi1> to vector<128x128xi32>
    %135 = arith.addi %130, %134 : vector<128x128xi32>
    %136 = vector.extract_strided_slice %3 {offsets = [5, 0], sizes = [1, 128], strides = [1, 1]} : vector<8x128xi32> to vector<1x128xi32>
    %137 = vector.broadcast %136 : vector<1x128xi32> to vector<128x128xi32>
    %138 = arith.cmpi eq, %137, %109 : vector<128x128xi32>
    %139 = arith.extui %138 : vector<128x128xi1> to vector<128x128xi32>
    %140 = arith.addi %135, %139 : vector<128x128xi32>
    %141 = vector.extract_strided_slice %3 {offsets = [6, 0], sizes = [1, 128], strides = [1, 1]} : vector<8x128xi32> to vector<1x128xi32>
    %142 = vector.broadcast %141 : vector<1x128xi32> to vector<128x128xi32>
    %143 = arith.cmpi eq, %142, %109 : vector<128x128xi32>
    %144 = arith.extui %143 : vector<128x128xi1> to vector<128x128xi32>
    %145 = arith.addi %140, %144 : vector<128x128xi32>
    %146 = vector.extract_strided_slice %3 {offsets = [7, 0], sizes = [1, 128], strides = [1, 1]} : vector<8x128xi32> to vector<1x128xi32>
    %147 = vector.broadcast %146 : vector<1x128xi32> to vector<128x128xi32>
    %148 = arith.cmpi eq, %147, %109 : vector<128x128xi32>
    %149 = arith.extui %148 : vector<128x128xi1> to vector<128x128xi32>
    %150 = arith.addi %145, %149 : vector<128x128xi32>
    %c0_13 = arith.constant 0 : index
    %c256 = arith.constant 256 : index
    %151 = vector.load %arg3[%c0_13, %c256] : memref<1x512xf32, #tpu.memory_space<vmem>>, vector<1x128xf32>
    %152 = arith.sitofp %150 : vector<128x128xi32> to vector<128x128xf32>
    %cst_14 = arith.constant dense<0.000000e+00> : vector<1x128xf32>
    %153 = tpu.matmul %151, %152, %cst_14 {dimension_numbers = #tpu.dot_dimension_numbers<[1], [0], [0], [1], [0, 0, 1, 1], [], []>} : vector<1x128xf32>, vector<128x128xf32>, vector<1x128xf32> -> vector<1x128xf32>
    %154 = arith.addf %104, %153 : vector<1x128xf32>
    %c512_i32_15 = arith.constant 512 : i32
    %155 = arith.muli %arg1, %c512_i32_15 : i32
    %c384_i32 = arith.constant 384 : i32
    %156 = arith.addi %155, %c384_i32 : i32
    %157 = tpu.iota {dimensions = array<i32: 0>} : vector<128x128xi32>
    %158 = vector.broadcast %156 : i32 to vector<128x128xi32>
    %159 = arith.addi %157, %158 : vector<128x128xi32>
    %c0_i32_16 = arith.constant 0 : i32
    %160 = vector.broadcast %c0_i32_16 : i32 to vector<128x128xi32>
    %161 = vector.extract_strided_slice %3 {offsets = [0, 0], sizes = [1, 128], strides = [1, 1]} : vector<8x128xi32> to vector<1x128xi32>
    %162 = vector.broadcast %161 : vector<1x128xi32> to vector<128x128xi32>
    %163 = arith.cmpi eq, %162, %159 : vector<128x128xi32>
    %164 = arith.extui %163 : vector<128x128xi1> to vector<128x128xi32>
    %165 = arith.addi %160, %164 : vector<128x128xi32>
    %166 = vector.extract_strided_slice %3 {offsets = [1, 0], sizes = [1, 128], strides = [1, 1]} : vector<8x128xi32> to vector<1x128xi32>
    %167 = vector.broadcast %166 : vector<1x128xi32> to vector<128x128xi32>
    %168 = arith.cmpi eq, %167, %159 : vector<128x128xi32>
    %169 = arith.extui %168 : vector<128x128xi1> to vector<128x128xi32>
    %170 = arith.addi %165, %169 : vector<128x128xi32>
    %171 = vector.extract_strided_slice %3 {offsets = [2, 0], sizes = [1, 128], strides = [1, 1]} : vector<8x128xi32> to vector<1x128xi32>
    %172 = vector.broadcast %171 : vector<1x128xi32> to vector<128x128xi32>
    %173 = arith.cmpi eq, %172, %159 : vector<128x128xi32>
    %174 = arith.extui %173 : vector<128x128xi1> to vector<128x128xi32>
    %175 = arith.addi %170, %174 : vector<128x128xi32>
    %176 = vector.extract_strided_slice %3 {offsets = [3, 0], sizes = [1, 128], strides = [1, 1]} : vector<8x128xi32> to vector<1x128xi32>
    %177 = vector.broadcast %176 : vector<1x128xi32> to vector<128x128xi32>
    %178 = arith.cmpi eq, %177, %159 : vector<128x128xi32>
    %179 = arith.extui %178 : vector<128x128xi1> to vector<128x128xi32>
    %180 = arith.addi %175, %179 : vector<128x128xi32>
    %181 = vector.extract_strided_slice %3 {offsets = [4, 0], sizes = [1, 128], strides = [1, 1]} : vector<8x128xi32> to vector<1x128xi32>
    %182 = vector.broadcast %181 : vector<1x128xi32> to vector<128x128xi32>
    %183 = arith.cmpi eq, %182, %159 : vector<128x128xi32>
    %184 = arith.extui %183 : vector<128x128xi1> to vector<128x128xi32>
    %185 = arith.addi %180, %184 : vector<128x128xi32>
    %186 = vector.extract_strided_slice %3 {offsets = [5, 0], sizes = [1, 128], strides = [1, 1]} : vector<8x128xi32> to vector<1x128xi32>
    %187 = vector.broadcast %186 : vector<1x128xi32> to vector<128x128xi32>
    %188 = arith.cmpi eq, %187, %159 : vector<128x128xi32>
    %189 = arith.extui %188 : vector<128x128xi1> to vector<128x128xi32>
    %190 = arith.addi %185, %189 : vector<128x128xi32>
    %191 = vector.extract_strided_slice %3 {offsets = [6, 0], sizes = [1, 128], strides = [1, 1]} : vector<8x128xi32> to vector<1x128xi32>
    %192 = vector.broadcast %191 : vector<1x128xi32> to vector<128x128xi32>
    %193 = arith.cmpi eq, %192, %159 : vector<128x128xi32>
    %194 = arith.extui %193 : vector<128x128xi1> to vector<128x128xi32>
    %195 = arith.addi %190, %194 : vector<128x128xi32>
    %196 = vector.extract_strided_slice %3 {offsets = [7, 0], sizes = [1, 128], strides = [1, 1]} : vector<8x128xi32> to vector<1x128xi32>
    %197 = vector.broadcast %196 : vector<1x128xi32> to vector<128x128xi32>
    %198 = arith.cmpi eq, %197, %159 : vector<128x128xi32>
    %199 = arith.extui %198 : vector<128x128xi1> to vector<128x128xi32>
    %200 = arith.addi %195, %199 : vector<128x128xi32>
    %c0_17 = arith.constant 0 : index
    %c384 = arith.constant 384 : index
    %201 = vector.load %arg3[%c0_17, %c384] : memref<1x512xf32, #tpu.memory_space<vmem>>, vector<1x128xf32>
    %202 = arith.sitofp %200 : vector<128x128xi32> to vector<128x128xf32>
    %cst_18 = arith.constant dense<0.000000e+00> : vector<1x128xf32>
    %203 = tpu.matmul %201, %202, %cst_18 {dimension_numbers = #tpu.dot_dimension_numbers<[1], [0], [0], [1], [0, 0, 1, 1], [], []>} : vector<1x128xf32>, vector<128x128xf32>, vector<1x128xf32> -> vector<1x128xf32>
    %204 = arith.addf %154, %203 : vector<1x128xf32>
    %c0_19 = arith.constant 0 : index
    %c0_20 = arith.constant 0 : index
    %205 = vector.load %arg5[%c0_19, %c0_20] : memref<1x128xf32, #tpu.memory_space<vmem>>, vector<1x128xf32>
    %206 = arith.addf %205, %204 : vector<1x128xf32>
    %c0_21 = arith.constant 0 : index
    %c0_22 = arith.constant 0 : index
    %207 = vector.load %arg5[%c0_21, %c0_22] : memref<1x128xf32, #tpu.memory_space<vmem>>, vector<1x128xf32>
    tpu.vector_store %arg5[%c0_21, %c0_22], %206 {strides = array<i32>} : memref<1x128xf32, #tpu.memory_space<vmem>>, vector<1x128xf32>,
    %c1_i32 = arith.constant 1 : i32
    %208 = arith.cmpi eq, %arg1, %c1_i32 : i32
    %209 = arith.extui %208 : i1 to i32
    %c0_i32_23 = arith.constant 0 : i32
    %210 = arith.cmpi ne, %209, %c0_i32_23 : i32
    scf.if %210 {
      %c0_24 = arith.constant 0 : index
      %c0_25 = arith.constant 0 : index
      %211 = vector.load %arg5[%c0_24, %c0_25] : memref<1x128xf32, #tpu.memory_space<vmem>>, vector<1x128xf32>
      %cst_26 = arith.constant 1.250000e-01 : f32
      %212 = vector.broadcast %cst_26 : f32 to vector<1x128xf32>
      %213 = arith.mulf %211, %212 : vector<1x128xf32>
      %c0_27 = arith.constant 0 : index
      %c0_28 = arith.constant 0 : index
      %214 = memref.load %arg4[%c0_27, %c0_28] : memref<1x1xf32, #tpu.memory_space<smem>>
      %215 = vector.broadcast %214 : f32 to vector<1x128xf32>
      %216 = arith.addf %213, %215 : vector<1x128xf32>
      %217 = arith.negf %216 : vector<1x128xf32>
      %218 = math.exp %217 : vector<1x128xf32>
      %cst_29 = arith.constant 1.000000e+00 : f32
      %219 = vector.broadcast %cst_29 : f32 to vector<1x128xf32>
      %220 = arith.addf %219, %218 : vector<1x128xf32>
      %221 = arith.divf %219, %220 : vector<1x128xf32>
      %c0_30 = arith.constant 0 : index
      %c0_31 = arith.constant 0 : index
      %222 = vector.load %arg5[%c0_30, %c0_31] : memref<1x128xf32, #tpu.memory_space<vmem>>, vector<1x128xf32>
      tpu.vector_store %arg5[%c0_30, %c0_31], %221 {strides = array<i32>} : memref<1x128xf32, #tpu.memory_space<vmem>>, vector<1x128xf32>,
    } else {
    }
    return
  }
  func.func @transform_0(%arg0: i32, %arg1: i32) -> (i32, i32) {
    %c0_i32 = arith.constant 0 : i32
    %c0_i32_0 = arith.constant 0 : i32
    return %c0_i32, %arg0 : i32, i32
  }
  func.func @transform_1(%arg0: i32, %arg1: i32) -> (i32, i32) {
    %c0_i32 = arith.constant 0 : i32
    %c0_i32_0 = arith.constant 0 : i32
    return %c0_i32, %arg1 : i32, i32
  }
  func.func @transform_2(%arg0: i32, %arg1: i32) -> (i32, i32) {
    %c0_i32 = arith.constant 0 : i32
    %c0_i32_0 = arith.constant 0 : i32
    %c0_i32_1 = arith.constant 0 : i32
    return %c0_i32, %c0_i32_0 : i32, i32
  }
  func.func @transform_3(%arg0: i32, %arg1: i32) -> (i32, i32) {
    %c0_i32 = arith.constant 0 : i32
    %c0_i32_0 = arith.constant 0 : i32
    return %c0_i32, %arg0 : i32, i32
  }
}

</mosaic_0001>

<llo_original>
// kernel: tpu_custom_call.1
$region0: #{tpu_custom_call.1}
  #allocation0 [shape = 'u32[]', space=smem, size = 0x4, offset = 0x4, fixed_abs, tag = 'smem constant byte address 0x4 - core index']
  #allocation1 [shape = 'u32[72,128]{1,0:T(1,128)}', space=vmem, size = 0x9000, scoped, tag = 'internal scratch']
  #allocation2 [shape = 'f32[1,1]{1,0:T(1,128)S(6)}', space=smem, size = 0x200, scoped, tag = 'scoped memory for tpu_custom_call.1']
  %s0 = inlined_call_operand.hbm [shape: s32[8,128], index: 0, kind: input, shape index: {}]
  %s1 = inlined_call_operand.hbm [shape: f32[1,1024], index: 1, kind: input, shape index: {}]
  %s2 = inlined_call_operand.<no memory space> [shape: f32[1,1], index: 2, kind: input, shape index: {}]
  %s3 = inlined_call_operand.hbm [shape: f32[1,128], index: 3, kind: output, shape index: {}]
  %s4 = sld [smem:[#allocation0]]
  $region61: #{tpu_custom_call.1} parent=0
    _
  %s6 = ssub.s32 1, %s4
  %s7 = scalar_select 0, %s6, %s4
  %8 = sst [smem:[#allocation2]] %s2
  $region1: #{tpu_custom_call.1} parent=0
    #allocation3 [shape = 'u8[4096]{0}', space=vmem, size = 0x1000, scoped, tag = 'input window, operand 0, single buffered']
    #allocation4 [shape = 's32[2]{0}', space=sflag, size = 0x8, scoped, tag = 'scoped memory for tpu_custom_call.1']
    #allocation5 [shape = 's32[2]{0}', space=sflag, size = 0x8, scoped, tag = 'scoped memory for tpu_custom_call.1']
    #allocation6 [shape = 'u8[4096]{0}', space=vmem, size = 0x1000, scoped, tag = 'input window, operand 1']
    #allocation7 [shape = 's32[2]{0}', space=sflag, size = 0x8, scoped, tag = 'scoped memory for tpu_custom_call.1']
    #allocation8 [shape = 'u8[512]{0}', space=vmem, size = 0x400, scoped, tag = 'output window, operand 0, single buffered']
    %9 = vsyncpa [#allocation4], 0
    %10 = vsyncpa [#allocation7], 0
    %s11 = scalar_lea.sflag [#allocation7], 1
    %12 = vsyncpa %s11, 0
    %13 = vsyncpa [#allocation5], 0
    loop: start=0, step=1, limit=4
    $region2: #{tpu_custom_call.1} parent=1 // loop_pre_header
      _
    $region3: #{tpu_custom_call.1} parent=1 // loop_header
      %s15 = sphi 0, %s19
      %p16 = scmp.ge.s32.totalorder %s15, 4
      %s22 = sphi 0, %s34
      %s23 = sphi 0, %s30
      %s24 = sphi 0, %s22
      %s25 = sphi 0, %s23
      %s26 = sphi 0, %s24
      %s27 = sphi 0, %s25
      %s37 = sphi 0, %s39
      %s40 = sphi 0, %s37
      %s41 = sphi 0, %s40
      %s57 = sphi 0, %s41
      %s63 = sphi 0, %s65
      %s66 = sphi 0, %s63
      %s67 = sphi 0, %s66
      %s83 = sphi 0, %s67
      %s87 = sphi 0, %s87
      %s89 = sphi 0, %s87
      %s90 = sphi 0, %s89
      %s104 = sphi 0, %s90
      %s110 = sphi 0, %s112
      %s113 = sphi 0, %s110
      %s114 = sphi 0, %s113
      %s130 = sphi 0, %s114
    $region4: #{tpu_custom_call.1} parent=1 // loop_header_branch
      %18 = sbr.rel (%p16) target = $region8
    $region5: #{tpu_custom_call.1} parent=1 // loop_body
      %s20 = ssub.s32 %s15, 1
      %s21 = ssub.s32 %s15, 2
      %s28 = sadd.s32 1, %s23
      %p29 = scmp.ge.s32.totalorder %s28, 2
      %s30 = scalar_select %p29, 0, %s28
      %s31 = sadd.s32 1, %s22
      %s32 = scalar_select %p29, %s31, %s22
      %p33 = scmp.ge.s32.totalorder %s32, 1
      %s34 = scalar_select %p33, 0, %s32
      %s35 = ssub.s32 %s22, %s34
      %p36 = scmp.eq.s32.totalorder %s35, 0
      %s38 = sadd.s32 %s37, 1
      %s39 = scalar_select %p36, %s37, %s38
      %p42 = pneg %p36
      %p43 = scmp.eq.s32.totalorder %s15, 1
      %p44 = por %p42, %p43
      %p45 = scmp.ne.s32.totalorder %s37, %s40
      %p46 = scmp.eq.s32.totalorder %s15, 0
      %p47 = por %p45, %p46
      %p48 = scmp.ne.s32.totalorder %s37, %s40
      %p49 = scmp.eq.s32.totalorder %s20, 1
      %p50 = por %p48, %p49
      %p51 = scmp.ne.s32.totalorder %s40, %s41
      %p52 = scmp.eq.s32.totalorder %s20, 0
      %p53 = por %p51, %p52
      %p54 = scmp.ne.s32.totalorder %s40, %s41
      %p55 = scmp.eq.s32.totalorder %s21, 1
      %p56 = por %p54, %p55
      %p58 = scmp.ne.s32.totalorder %s41, %s57
      %p59 = scmp.eq.s32.totalorder %s21, 0
      %p60 = por %p58, %p59
      %s61 = ssub.s32 %s23, %s30
      %p62 = scmp.eq.s32.totalorder %s61, 0
      %s64 = sadd.s32 %s63, 1
      %s65 = scalar_select %p62, %s63, %s64
      %p68 = pneg %p62
      %p69 = scmp.eq.s32.totalorder %s15, 1
      %p70 = por %p68, %p69
      %p71 = scmp.ne.s32.totalorder %s63, %s66
      %p72 = scmp.eq.s32.totalorder %s15, 0
      %p73 = por %p71, %p72
      %p74 = scmp.ne.s32.totalorder %s63, %s66
      %p75 = scmp.eq.s32.totalorder %s20, 1
      %p76 = por %p74, %p75
      %p77 = scmp.ne.s32.totalorder %s66, %s67
      %p78 = scmp.eq.s32.totalorder %s20, 0
      %p79 = por %p77, %p78
      %p80 = scmp.ne.s32.totalorder %s66, %s67
      %p81 = scmp.eq.s32.totalorder %s21, 1
      %p82 = por %p80, %p81
      %p84 = scmp.ne.s32.totalorder %s67, %s83
      %p85 = scmp.eq.s32.totalorder %s21, 0
      %p86 = por %p84, %p85
      %s88 = sadd.s32 %s87, 1
      %p91 = scmp.eq.s32.totalorder %s15, 1
      %p92 = scmp.ne.s32.totalorder %s87, %s89
      %p93 = scmp.eq.s32.totalorder %s15, 0
      %p94 = por %p92, %p93
      %p95 = scmp.ne.s32.totalorder %s87, %s89
      %p96 = scmp.eq.s32.totalorder %s20, 1
      %p97 = por %p95, %p96
      %p98 = scmp.ne.s32.totalorder %s89, %s90
      %p99 = scmp.eq.s32.totalorder %s20, 0
      %p100 = por %p98, %p99
      %p101 = scmp.ne.s32.totalorder %s89, %s90
      %p102 = scmp.eq.s32.totalorder %s21, 1
      %p103 = por %p101, %p102
      %p105 = scmp.ne.s32.totalorder %s90, %s104
      %p106 = scmp.eq.s32.totalorder %s21, 0
      %p107 = por %p105, %p106
      %s108 = ssub.s32 %s22, %s34
      %p109 = scmp.eq.s32.totalorder %s108, 0
      %s111 = sadd.s32 %s110, 1
      %s112 = scalar_select %p109, %s110, %s111
      %p115 = pneg %p109
      %p116 = scmp.eq.s32.totalorder %s15, 1
      %p117 = por %p115, %p116
      %p118 = scmp.ne.s32.totalorder %s110, %s113
      %p119 = scmp.eq.s32.totalorder %s15, 0
      %p120 = por %p118, %p119
      %p121 = scmp.ne.s32.totalorder %s110, %s113
      %p122 = scmp.eq.s32.totalorder %s20, 1
      %p123 = por %p121, %p122
      %p124 = scmp.ne.s32.totalorder %s113, %s114
      %p125 = scmp.eq.s32.totalorder %s20, 0
      %p126 = por %p124, %p125
      %p127 = scmp.ne.s32.totalorder %s113, %s114
      %p128 = scmp.eq.s32.totalorder %s21, 1
      %p129 = por %p127, %p128
      %p131 = scmp.ne.s32.totalorder %s114, %s130
      %p132 = scmp.eq.s32.totalorder %s21, 0
      %p133 = por %p131, %p132
      %p134 = scmp.le.s32.totalorder 1, %s15
      %p135 = scmp.lt.s32.totalorder %s15, 3
      %p136 = pnand %p134, %p135
      %p137 = pneg %p136
      // Predicated region
      $region9: #{tpu_custom_call.1} parent=5 // pred_check
        _
      $region10: #{tpu_custom_call.1} parent=5 // pred_check_branch
        %139 = sbr.rel (%p136) target = $region12
      $region11: #{tpu_custom_call.1} parent=5 // pred_region
        %s140 = ssub.s32 %s15, 1
        // Predicated region
        $region13: #{tpu_custom_call.1} parent=11 // pred_check
          %p141 = pneg %p53
        $region14: #{tpu_custom_call.1} parent=11 // pred_check_branch
          %143 = sbr.rel (%p141) target = $region16
        $region15: #{tpu_custom_call.1} parent=11 // pred_region
          %145 = vsyncadd [#allocation4], 0
          %s146 = smul.addr %s24, 8
          %s147 = scalar_lea.hbm %s0, %s146
          %s149 = sshll.u32 %s147, 4
          %s150 = int_to_ptr.hbm [resolvable:$true] %s149
          %s151 = sshll.u32 [#allocation3], 4
          %s152 = int_to_ptr.vmem [resolvable:$true] %s151
          %154 = dma.hbm_to_vmem [thread:$0]  %s150, 128, %s152, [#allocation4]
        $region16: #{tpu_custom_call.1} parent=11 // pred_fallthru
          _
        // Predicated region
        $region17: #{tpu_custom_call.1} parent=11 // pred_check
          %p155 = pneg %p100
        $region18: #{tpu_custom_call.1} parent=11 // pred_check_branch
          %157 = sbr.rel (%p155) target = $region20
        $region19: #{tpu_custom_call.1} parent=11 // pred_region
          _
        $region20: #{tpu_custom_call.1} parent=11 // pred_fallthru
          _
      $region12: #{tpu_custom_call.1} parent=5 // pred_fallthru
        _
      %p158 = scmp.lt.s32.totalorder %s15, 2
      // Predicated region
      $region21: #{tpu_custom_call.1} parent=5 // pred_check
        %p159 = pneg %p158
      $region22: #{tpu_custom_call.1} parent=5 // pred_check_branch
        %161 = sbr.rel (%p159) target = $region24
      $region23: #{tpu_custom_call.1} parent=5 // pred_region
        // Predicated region
        $region25: #{tpu_custom_call.1} parent=23 // pred_check
          %p162 = pneg %p73
        $region26: #{tpu_custom_call.1} parent=23 // pred_check_branch
          %164 = sbr.rel (%p162) target = $region28
        $region27: #{tpu_custom_call.1} parent=23 // pred_region
          %s165 = sand.u32 %s63, 1
          %s166 = scalar_lea.sflag [#allocation7], %s165
          %s167 = sand.u32 %s63, 1
          %s168 = smul.addr %s167, 4
          %s169 = scalar_lea.vmem [#allocation6], %s168
          %s170 = smul.u32 4, %s23
          %172 = vsyncadd %s166, 0
          %s173 = scalar_lea.hbm %s1, %s170
          %s175 = sshll.u32 %s173, 4
          %s176 = int_to_ptr.hbm [resolvable:$true] %s175
          %s177 = sshll.u32 %s169, 4
          %s178 = int_to_ptr.vmem [resolvable:$true] %s177
          %180 = dma.hbm_to_vmem [thread:$0]  %s176, 64, %s178, %s166
        $region28: #{tpu_custom_call.1} parent=23 // pred_fallthru
          _
      $region24: #{tpu_custom_call.1} parent=5 // pred_fallthru
        _
      %p181 = scmp.le.s32.totalorder 1, %s15
      %p182 = scmp.lt.s32.totalorder %s15, 3
      %p183 = pnand %p181, %p182
      %p184 = pneg %p183
      // Predicated region
      $region29: #{tpu_custom_call.1} parent=5 // pred_check
        _
      $region30: #{tpu_custom_call.1} parent=5 // pred_check_branch
        %186 = sbr.rel (%p183) target = $region32
      $region31: #{tpu_custom_call.1} parent=5 // pred_region
        %s187 = ssub.s32 %s15, 1
        // Predicated region
        $region33: #{tpu_custom_call.1} parent=31 // pred_check
          %p188 = pneg %p53
        $region34: #{tpu_custom_call.1} parent=31 // pred_check_branch
          %190 = sbr.rel (%p188) target = $region36
        $region35: #{tpu_custom_call.1} parent=31 // pred_region
          %192 = dma.done [#allocation4], 128
        $region36: #{tpu_custom_call.1} parent=31 // pred_fallthru
          _
        %s193 = sand.u32 %s66, 1
        %s194 = scalar_lea.sflag [#allocation7], %s193
        %s195 = sand.u32 %s66, 1
        %s196 = smul.addr %s195, 4
        %s197 = scalar_lea.vmem [#allocation6], %s196
        // Predicated region
        $region37: #{tpu_custom_call.1} parent=31 // pred_check
          %p198 = pneg %p79
        $region38: #{tpu_custom_call.1} parent=31 // pred_check_branch
          %200 = sbr.rel (%p198) target = $region40
        $region39: #{tpu_custom_call.1} parent=31 // pred_region
          %202 = dma.done %s194, 64
        $region40: #{tpu_custom_call.1} parent=31 // pred_fallthru
          _
        %p203 = pneg %p53
        %p204 = pneg %p50
        %s205 = sand.u32 %s66, 1
        %s206 = scalar_lea.sflag [#allocation7], %s205
        %s207 = sand.u32 %s66, 1
        %s208 = smul.addr %s207, 4
        %s209 = scalar_lea.vmem [#allocation6], %s208
        %p210 = pneg %p79
        %p211 = pneg %p76
        %p212 = pneg %p100
        %p213 = pneg %p97
        %p214 = pneg %p126
        %p215 = pneg %p123
        %s216 = smul.u32 4, %s25
        %p217 = scmp.eq.s32.totalorder %s25, 0
        // Predicated region
        $region41: #{tpu_custom_call.1} parent=31 // pred_check
          %p218 = pneg %p217
        $region42: #{tpu_custom_call.1} parent=31 // pred_check_branch
          %220 = sbr.rel (%p218) target = $region44
        $region43: #{tpu_custom_call.1} parent=31 // pred_region
          %221 = vst [vmem:[#allocation8] sm:$0x1] 0.0
        $region44: #{tpu_custom_call.1} parent=31 // pred_fallthru
          _
        %v222 = vld [vmem:[#allocation3] sm:$0xff]
        %s223 = smul.u32 %s25, 512
        %v224 = vlaneseq
        %v225 = vshrl.u32 %v224, 7
        %v226 = vadd.s32 %v225, 8
        %v227 = vadd.s32 %v225, 16
        %v228 = vadd.s32 %v225, 24
        %v229 = vadd.s32 %v225, 32
        %v230 = vadd.s32 %v225, 40
        %v231 = vadd.s32 %v225, 48
        %v232 = vadd.s32 %v225, 56
        %v233 = vadd.s32 %v225, 64
        %v234 = vadd.s32 %v225, 72
        %v235 = vadd.s32 %v225, 80
        %v236 = vadd.s32 %v225, 88
        %v237 = vadd.s32 %v225, 96
        %v238 = vadd.s32 %v225, 104
        %v239 = vadd.s32 %v225, 112
        %v240 = vadd.s32 %v225, 120
        %v241 = vstv %s223
        %v242 = vadd.s32 %v225, %v241
        %v243 = vadd.s32 %v226, %v241
        %v244 = vadd.s32 %v227, %v241
        %v245 = vadd.s32 %v228, %v241
        %v246 = vadd.s32 %v229, %v241
        %v247 = vadd.s32 %v230, %v241
        %v248 = vadd.s32 %v231, %v241
        %v249 = vadd.s32 %v232, %v241
        %v250 = vadd.s32 %v233, %v241
        %v251 = vadd.s32 %v234, %v241
        %v252 = vadd.s32 %v235, %v241
        %v253 = vadd.s32 %v236, %v241
        %v254 = vadd.s32 %v237, %v241
        %v255 = vadd.s32 %v238, %v241
        %v256 = vadd.s32 %v239, %v241
        %v257 = vadd.s32 %v240, %v241
        %v258 = vperm.slane %v222, 0
        %vm259 = vcmp.eq.s32.totalorder %v258, %v242
        %vm260 = vcmp.eq.s32.totalorder %v258, %v243
        %vm261 = vcmp.eq.s32.totalorder %v258, %v244
        %vm262 = vcmp.eq.s32.totalorder %v258, %v245
        %vm263 = vcmp.eq.s32.totalorder %v258, %v246
        %vm264 = vcmp.eq.s32.totalorder %v258, %v247
        %vm265 = vcmp.eq.s32.totalorder %v258, %v248
        %vm266 = vcmp.eq.s32.totalorder %v258, %v249
        %vm267 = vcmp.eq.s32.totalorder %v258, %v250
        %vm268 = vcmp.eq.s32.totalorder %v258, %v251
        %vm269 = vcmp.eq.s32.totalorder %v258, %v252
        %vm270 = vcmp.eq.s32.totalorder %v258, %v253
        %vm271 = vcmp.eq.s32.totalorder %v258, %v254
        %vm272 = vcmp.eq.s32.totalorder %v258, %v255
        %vm273 = vcmp.eq.s32.totalorder %v258, %v256
        %vm274 = vcmp.eq.s32.totalorder %v258, %v257
        %v275 = vsel %vm259, 1, 0
        %v276 = vsel %vm260, 1, 0
        %v277 = vsel %vm261, 1, 0
        %v278 = vsel %vm262, 1, 0
        %v279 = vsel %vm263, 1, 0
        %v280 = vsel %vm264, 1, 0
        %v281 = vsel %vm265, 1, 0
        %v282 = vsel %vm266, 1, 0
        %v283 = vsel %vm267, 1, 0
        %v284 = vsel %vm268, 1, 0
        %v285 = vsel %vm269, 1, 0
        %v286 = vsel %vm270, 1, 0
        %v287 = vsel %vm271, 1, 0
        %v288 = vsel %vm272, 1, 0
        %v289 = vsel %vm273, 1, 0
        %v290 = vsel %vm274, 1, 0
        %v291 = vperm.slane %v222, 1
        %vm292 = vcmp.eq.s32.totalorder %v291, %v242
        %vm293 = vcmp.eq.s32.totalorder %v291, %v243
        %vm294 = vcmp.eq.s32.totalorder %v291, %v244
        %vm295 = vcmp.eq.s32.totalorder %v291, %v245
        %vm296 = vcmp.eq.s32.totalorder %v291, %v246
        %vm297 = vcmp.eq.s32.totalorder %v291, %v247
        %vm298 = vcmp.eq.s32.totalorder %v291, %v248
        %vm299 = vcmp.eq.s32.totalorder %v291, %v249
        %vm300 = vcmp.eq.s32.totalorder %v291, %v250
        %vm301 = vcmp.eq.s32.totalorder %v291, %v251
        %vm302 = vcmp.eq.s32.totalorder %v291, %v252
        %vm303 = vcmp.eq.s32.totalorder %v291, %v253
        %vm304 = vcmp.eq.s32.totalorder %v291, %v254
        %vm305 = vcmp.eq.s32.totalorder %v291, %v255
        %vm306 = vcmp.eq.s32.totalorder %v291, %v256
        %vm307 = vcmp.eq.s32.totalorder %v291, %v257
        %v308 = vsel %vm292, 1, 0
        %v309 = vsel %vm293, 1, 0
        %v310 = vsel %vm294, 1, 0
        %v311 = vsel %vm295, 1, 0
        %v312 = vsel %vm296, 1, 0
        %v313 = vsel %vm297, 1, 0
        %v314 = vsel %vm298, 1, 0
        %v315 = vsel %vm299, 1, 0
        %v316 = vsel %vm300, 1, 0
        %v317 = vsel %vm301, 1, 0
        %v318 = vsel %vm302, 1, 0
        %v319 = vsel %vm303, 1, 0
        %v320 = vsel %vm304, 1, 0
        %v321 = vsel %vm305, 1, 0
        %v322 = vsel %vm306, 1, 0
        %v323 = vsel %vm307, 1, 0
        %v324 = vadd.s32 %v275, %v308
        %v325 = vadd.s32 %v276, %v309
        %v326 = vadd.s32 %v277, %v310
        %v327 = vadd.s32 %v278, %v311
        %v328 = vadd.s32 %v279, %v312
        %v329 = vadd.s32 %v280, %v313
        %v330 = vadd.s32 %v281, %v314
        %v331 = vadd.s32 %v282, %v315
        %v332 = vadd.s32 %v283, %v316
        %v333 = vadd.s32 %v284, %v317
        %v334 = vadd.s32 %v285, %v318
        %v335 = vadd.s32 %v286, %v319
        %v336 = vadd.s32 %v287, %v320
        %v337 = vadd.s32 %v288, %v321
        %v338 = vadd.s32 %v289, %v322
        %v339 = vadd.s32 %v290, %v323
        %v340 = vperm.slane %v222, 2
        %vm341 = vcmp.eq.s32.totalorder %v340, %v242
        %vm342 = vcmp.eq.s32.totalorder %v340, %v243
        %vm343 = vcmp.eq.s32.totalorder %v340, %v244
        %vm344 = vcmp.eq.s32.totalorder %v340, %v245
        %vm345 = vcmp.eq.s32.totalorder %v340, %v246
        %vm346 = vcmp.eq.s32.totalorder %v340, %v247
        %vm347 = vcmp.eq.s32.totalorder %v340, %v248
        %vm348 = vcmp.eq.s32.totalorder %v340, %v249
        %vm349 = vcmp.eq.s32.totalorder %v340, %v250
        %vm350 = vcmp.eq.s32.totalorder %v340, %v251
        %vm351 = vcmp.eq.s32.totalorder %v340, %v252
        %vm352 = vcmp.eq.s32.totalorder %v340, %v253
        %vm353 = vcmp.eq.s32.totalorder %v340, %v254
        %vm354 = vcmp.eq.s32.totalorder %v340, %v255
        %vm355 = vcmp.eq.s32.totalorder %v340, %v256
        %vm356 = vcmp.eq.s32.totalorder %v340, %v257
        %v357 = vsel %vm341, 1, 0
        %v358 = vsel %vm342, 1, 0
        %v359 = vsel %vm343, 1, 0
        %v360 = vsel %vm344, 1, 0
        %v361 = vsel %vm345, 1, 0
        %v362 = vsel %vm346, 1, 0
        %v363 = vsel %vm347, 1, 0
        %v364 = vsel %vm348, 1, 0
        %v365 = vsel %vm349, 1, 0
        %v366 = vsel %vm350, 1, 0
        %v367 = vsel %vm351, 1, 0
        %v368 = vsel %vm352, 1, 0
        %v369 = vsel %vm353, 1, 0
        %v370 = vsel %vm354, 1, 0
        %v371 = vsel %vm355, 1, 0
        %v372 = vsel %vm356, 1, 0
        %v373 = vadd.s32 %v324, %v357
        %v374 = vadd.s32 %v325, %v358
        %v375 = vadd.s32 %v326, %v359
        %v376 = vadd.s32 %v327, %v360
        %v377 = vadd.s32 %v328, %v361
        %v378 = vadd.s32 %v329, %v362
        %v379 = vadd.s32 %v330, %v363
        %v380 = vadd.s32 %v331, %v364
        %v381 = vadd.s32 %v332, %v365
        %v382 = vadd.s32 %v333, %v366
        %v383 = vadd.s32 %v334, %v367
        %v384 = vadd.s32 %v335, %v368
        %v385 = vadd.s32 %v336, %v369
        %v386 = vadd.s32 %v337, %v370
        %v387 = vadd.s32 %v338, %v371
        %v388 = vadd.s32 %v339, %v372
        %v389 = vperm.slane %v222, 3
        %vm390 = vcmp.eq.s32.totalorder %v389, %v242
        %vm391 = vcmp.eq.s32.totalorder %v389, %v243
        %vm392 = vcmp.eq.s32.totalorder %v389, %v244
        %vm393 = vcmp.eq.s32.totalorder %v389, %v245
        %vm394 = vcmp.eq.s32.totalorder %v389, %v246
        %vm395 = vcmp.eq.s32.totalorder %v389, %v247
        %vm396 = vcmp.eq.s32.totalorder %v389, %v248
        %vm397 = vcmp.eq.s32.totalorder %v389, %v249
        %vm398 = vcmp.eq.s32.totalorder %v389, %v250
        %vm399 = vcmp.eq.s32.totalorder %v389, %v251
        %vm400 = vcmp.eq.s32.totalorder %v389, %v252
        %vm401 = vcmp.eq.s32.totalorder %v389, %v253
        %vm402 = vcmp.eq.s32.totalorder %v389, %v254
        %vm403 = vcmp.eq.s32.totalorder %v389, %v255
        %vm404 = vcmp.eq.s32.totalorder %v389, %v256
        %vm405 = vcmp.eq.s32.totalorder %v389, %v257
        %v406 = vsel %vm390, 1, 0
        %v407 = vsel %vm391, 1, 0
        %v408 = vsel %vm392, 1, 0
        %v409 = vsel %vm393, 1, 0
        %v410 = vsel %vm394, 1, 0
        %v411 = vsel %vm395, 1, 0
        %v412 = vsel %vm396, 1, 0
        %v413 = vsel %vm397, 1, 0
        %v414 = vsel %vm398, 1, 0
        %v415 = vsel %vm399, 1, 0
        %v416 = vsel %vm400, 1, 0
        %v417 = vsel %vm401, 1, 0
        %v418 = vsel %vm402, 1, 0
        %v419 = vsel %vm403, 1, 0
        %v420 = vsel %vm404, 1, 0
        %v421 = vsel %vm405, 1, 0
        %v422 = vadd.s32 %v373, %v406
        %v423 = vadd.s32 %v374, %v407
        %v424 = vadd.s32 %v375, %v408
        %v425 = vadd.s32 %v376, %v409
        %v426 = vadd.s32 %v377, %v410
        %v427 = vadd.s32 %v378, %v411
        %v428 = vadd.s32 %v379, %v412
        %v429 = vadd.s32 %v380, %v413
        %v430 = vadd.s32 %v381, %v414
        %v431 = vadd.s32 %v382, %v415
        %v432 = vadd.s32 %v383, %v416
        %v433 = vadd.s32 %v384, %v417
        %v434 = vadd.s32 %v385, %v418
        %v435 = vadd.s32 %v386, %v419
        %v436 = vadd.s32 %v387, %v420
        %v437 = vadd.s32 %v388, %v421
        %v438 = vperm.slane %v222, 4
        %vm439 = vcmp.eq.s32.totalorder %v438, %v242
        %vm440 = vcmp.eq.s32.totalorder %v438, %v243
        %vm441 = vcmp.eq.s32.totalorder %v438, %v244
        %vm442 = vcmp.eq.s32.totalorder %v438, %v245
        %vm443 = vcmp.eq.s32.totalorder %v438, %v246
        %vm444 = vcmp.eq.s32.totalorder %v438, %v247
        %vm445 = vcmp.eq.s32.totalorder %v438, %v248
        %vm446 = vcmp.eq.s32.totalorder %v438, %v249
        %vm447 = vcmp.eq.s32.totalorder %v438, %v250
        %vm448 = vcmp.eq.s32.totalorder %v438, %v251
        %vm449 = vcmp.eq.s32.totalorder %v438, %v252
        %vm450 = vcmp.eq.s32.totalorder %v438, %v253
        %vm451 = vcmp.eq.s32.totalorder %v438, %v254
        %vm452 = vcmp.eq.s32.totalorder %v438, %v255
        %vm453 = vcmp.eq.s32.totalorder %v438, %v256
        %vm454 = vcmp.eq.s32.totalorder %v438, %v257
        %v455 = vsel %vm439, 1, 0
        %v456 = vsel %vm440, 1, 0
        %v457 = vsel %vm441, 1, 0
        %v458 = vsel %vm442, 1, 0
        %v459 = vsel %vm443, 1, 0
        %v460 = vsel %vm444, 1, 0
        %v461 = vsel %vm445, 1, 0
        %v462 = vsel %vm446, 1, 0
        %v463 = vsel %vm447, 1, 0
        %v464 = vsel %vm448, 1, 0
        %v465 = vsel %vm449, 1, 0
        %v466 = vsel %vm450, 1, 0
        %v467 = vsel %vm451, 1, 0
        %v468 = vsel %vm452, 1, 0
        %v469 = vsel %vm453, 1, 0
        %v470 = vsel %vm454, 1, 0
        %v471 = vadd.s32 %v422, %v455
        %v472 = vadd.s32 %v423, %v456
        %v473 = vadd.s32 %v424, %v457
        %v474 = vadd.s32 %v425, %v458
        %v475 = vadd.s32 %v426, %v459
        %v476 = vadd.s32 %v427, %v460
        %v477 = vadd.s32 %v428, %v461
        %v478 = vadd.s32 %v429, %v462
        %v479 = vadd.s32 %v430, %v463
        %v480 = vadd.s32 %v431, %v464
        %v481 = vadd.s32 %v432, %v465
        %v482 = vadd.s32 %v433, %v466
        %v483 = vadd.s32 %v434, %v467
        %v484 = vadd.s32 %v435, %v468
        %v485 = vadd.s32 %v436, %v469
        %v486 = vadd.s32 %v437, %v470
        %v487 = vperm.slane %v222, 5
        %vm488 = vcmp.eq.s32.totalorder %v487, %v242
        %vm489 = vcmp.eq.s32.totalorder %v487, %v243
        %vm490 = vcmp.eq.s32.totalorder %v487, %v244
        %vm491 = vcmp.eq.s32.totalorder %v487, %v245
        %vm492 = vcmp.eq.s32.totalorder %v487, %v246
        %vm493 = vcmp.eq.s32.totalorder %v487, %v247
        %vm494 = vcmp.eq.s32.totalorder %v487, %v248
        %vm495 = vcmp.eq.s32.totalorder %v487, %v249
        %vm496 = vcmp.eq.s32.totalorder %v487, %v250
        %vm497 = vcmp.eq.s32.totalorder %v487, %v251
        %vm498 = vcmp.eq.s32.totalorder %v487, %v252
        %vm499 = vcmp.eq.s32.totalorder %v487, %v253
        %vm500 = vcmp.eq.s32.totalorder %v487, %v254
        %vm501 = vcmp.eq.s32.totalorder %v487, %v255
        %vm502 = vcmp.eq.s32.totalorder %v487, %v256
        %vm503 = vcmp.eq.s32.totalorder %v487, %v257
        %v504 = vsel %vm488, 1, 0
        %v505 = vsel %vm489, 1, 0
        %v506 = vsel %vm490, 1, 0
        %v507 = vsel %vm491, 1, 0
        %v508 = vsel %vm492, 1, 0
        %v509 = vsel %vm493, 1, 0
        %v510 = vsel %vm494, 1, 0
        %v511 = vsel %vm495, 1, 0
        %v512 = vsel %vm496, 1, 0
        %v513 = vsel %vm497, 1, 0
        %v514 = vsel %vm498, 1, 0
        %v515 = vsel %vm499, 1, 0
        %v516 = vsel %vm500, 1, 0
        %v517 = vsel %vm501, 1, 0
        %v518 = vsel %vm502, 1, 0
        %v519 = vsel %vm503, 1, 0
        %v520 = vadd.s32 %v471, %v504
        %v521 = vadd.s32 %v472, %v505
        %v522 = vadd.s32 %v473, %v506
        %v523 = vadd.s32 %v474, %v507
        %v524 = vadd.s32 %v475, %v508
        %v525 = vadd.s32 %v476, %v509
        %v526 = vadd.s32 %v477, %v510
        %v527 = vadd.s32 %v478, %v511
        %v528 = vadd.s32 %v479, %v512
        %v529 = vadd.s32 %v480, %v513
        %v530 = vadd.s32 %v481, %v514
        %v531 = vadd.s32 %v482, %v515
        %v532 = vadd.s32 %v483, %v516
        %v533 = vadd.s32 %v484, %v517
        %v534 = vadd.s32 %v485, %v518
        %v535 = vadd.s32 %v486, %v519
        %v536 = vperm.slane %v222, 6
        %vm537 = vcmp.eq.s32.totalorder %v536, %v242
        %vm538 = vcmp.eq.s32.totalorder %v536, %v243
        %vm539 = vcmp.eq.s32.totalorder %v536, %v244
        %vm540 = vcmp.eq.s32.totalorder %v536, %v245
        %vm541 = vcmp.eq.s32.totalorder %v536, %v246
        %vm542 = vcmp.eq.s32.totalorder %v536, %v247
        %vm543 = vcmp.eq.s32.totalorder %v536, %v248
        %vm544 = vcmp.eq.s32.totalorder %v536, %v249
        %vm545 = vcmp.eq.s32.totalorder %v536, %v250
        %vm546 = vcmp.eq.s32.totalorder %v536, %v251
        %vm547 = vcmp.eq.s32.totalorder %v536, %v252
        %vm548 = vcmp.eq.s32.totalorder %v536, %v253
        %vm549 = vcmp.eq.s32.totalorder %v536, %v254
        %vm550 = vcmp.eq.s32.totalorder %v536, %v255
        %vm551 = vcmp.eq.s32.totalorder %v536, %v256
        %vm552 = vcmp.eq.s32.totalorder %v536, %v257
        %v553 = vsel %vm537, 1, 0
        %v554 = vsel %vm538, 1, 0
        %v555 = vsel %vm539, 1, 0
        %v556 = vsel %vm540, 1, 0
        %v557 = vsel %vm541, 1, 0
        %v558 = vsel %vm542, 1, 0
        %v559 = vsel %vm543, 1, 0
        %v560 = vsel %vm544, 1, 0
        %v561 = vsel %vm545, 1, 0
        %v562 = vsel %vm546, 1, 0
        %v563 = vsel %vm547, 1, 0
        %v564 = vsel %vm548, 1, 0
        %v565 = vsel %vm549, 1, 0
        %v566 = vsel %vm550, 1, 0
        %v567 = vsel %vm551, 1, 0
        %v568 = vsel %vm552, 1, 0
        %v569 = vadd.s32 %v520, %v553
        %v570 = vadd.s32 %v521, %v554
        %v571 = vadd.s32 %v522, %v555
        %v572 = vadd.s32 %v523, %v556
        %v573 = vadd.s32 %v524, %v557
        %v574 = vadd.s32 %v525, %v558
        %v575 = vadd.s32 %v526, %v559
        %v576 = vadd.s32 %v527, %v560
        %v577 = vadd.s32 %v528, %v561
        %v578 = vadd.s32 %v529, %v562
        %v579 = vadd.s32 %v530, %v563
        %v580 = vadd.s32 %v531, %v564
        %v581 = vadd.s32 %v532, %v565
        %v582 = vadd.s32 %v533, %v566
        %v583 = vadd.s32 %v534, %v567
        %v584 = vadd.s32 %v535, %v568
        %v585 = vperm.slane %v222, 7
        %vm586 = vcmp.eq.s32.totalorder %v585, %v242
        %vm587 = vcmp.eq.s32.totalorder %v585, %v243
        %vm588 = vcmp.eq.s32.totalorder %v585, %v244
        %vm589 = vcmp.eq.s32.totalorder %v585, %v245
        %vm590 = vcmp.eq.s32.totalorder %v585, %v246
        %vm591 = vcmp.eq.s32.totalorder %v585, %v247
        %vm592 = vcmp.eq.s32.totalorder %v585, %v248
        %vm593 = vcmp.eq.s32.totalorder %v585, %v249
        %vm594 = vcmp.eq.s32.totalorder %v585, %v250
        %vm595 = vcmp.eq.s32.totalorder %v585, %v251
        %vm596 = vcmp.eq.s32.totalorder %v585, %v252
        %vm597 = vcmp.eq.s32.totalorder %v585, %v253
        %vm598 = vcmp.eq.s32.totalorder %v585, %v254
        %vm599 = vcmp.eq.s32.totalorder %v585, %v255
        %vm600 = vcmp.eq.s32.totalorder %v585, %v256
        %vm601 = vcmp.eq.s32.totalorder %v585, %v257
        %v602 = vsel %vm586, 1, 0
        %v603 = vsel %vm587, 1, 0
        %v604 = vsel %vm588, 1, 0
        %v605 = vsel %vm589, 1, 0
        %v606 = vsel %vm590, 1, 0
        %v607 = vsel %vm591, 1, 0
        %v608 = vsel %vm592, 1, 0
        %v609 = vsel %vm593, 1, 0
        %v610 = vsel %vm594, 1, 0
        %v611 = vsel %vm595, 1, 0
        %v612 = vsel %vm596, 1, 0
        %v613 = vsel %vm597, 1, 0
        %v614 = vsel %vm598, 1, 0
        %v615 = vsel %vm599, 1, 0
        %v616 = vsel %vm600, 1, 0
        %v617 = vsel %vm601, 1, 0
        %v618 = vadd.s32 %v569, %v602
        %v619 = vadd.s32 %v570, %v603
        %v620 = vadd.s32 %v571, %v604
        %v621 = vadd.s32 %v572, %v605
        %v622 = vadd.s32 %v573, %v606
        %v623 = vadd.s32 %v574, %v607
        %v624 = vadd.s32 %v575, %v608
        %v625 = vadd.s32 %v576, %v609
        %v626 = vadd.s32 %v577, %v610
        %v627 = vadd.s32 %v578, %v611
        %v628 = vadd.s32 %v579, %v612
        %v629 = vadd.s32 %v580, %v613
        %v630 = vadd.s32 %v581, %v614
        %v631 = vadd.s32 %v582, %v615
        %v632 = vadd.s32 %v583, %v616
        %v633 = vadd.s32 %v584, %v617
        %v634 = vld [vmem:[%s197] sm:$0x1]
        %v635 = vcvt.s32.f32 %v618
        %v636 = vcvt.s32.f32 %v619
        %v637 = vcvt.s32.f32 %v620
        %v638 = vcvt.s32.f32 %v621
        %v639 = vcvt.s32.f32 %v622
        %v640 = vcvt.s32.f32 %v623
        %v641 = vcvt.s32.f32 %v624
        %v642 = vcvt.s32.f32 %v625
        %v643 = vcvt.s32.f32 %v626
        %v644 = vcvt.s32.f32 %v627
        %v645 = vcvt.s32.f32 %v628
        %v646 = vcvt.s32.f32 %v629
        %v647 = vcvt.s32.f32 %v630
        %v648 = vcvt.s32.f32 %v631
        %v649 = vcvt.s32.f32 %v632
        %v650 = vcvt.s32.f32 %v633
        %s651 = sadd.s32 %s223, 128
        %v652 = vstv %s651
        %v653 = vadd.s32 %v225, %v652
        %v654 = vadd.s32 %v226, %v652
        %v655 = vadd.s32 %v227, %v652
        %v656 = vadd.s32 %v228, %v652
        %v657 = vadd.s32 %v229, %v652
        %v658 = vadd.s32 %v230, %v652
        %v659 = vadd.s32 %v231, %v652
        %v660 = vadd.s32 %v232, %v652
        %v661 = vadd.s32 %v233, %v652
        %v662 = vadd.s32 %v234, %v652
        %v663 = vadd.s32 %v235, %v652
        %v664 = vadd.s32 %v236, %v652
        %v665 = vadd.s32 %v237, %v652
        %v666 = vadd.s32 %v238, %v652
        %v667 = vadd.s32 %v239, %v652
        %v668 = vadd.s32 %v240, %v652
        %vm669 = vcmp.eq.s32.totalorder %v258, %v653
        %vm670 = vcmp.eq.s32.totalorder %v258, %v654
        %vm671 = vcmp.eq.s32.totalorder %v258, %v655
        %vm672 = vcmp.eq.s32.totalorder %v258, %v656
        %vm673 = vcmp.eq.s32.totalorder %v258, %v657
        %vm674 = vcmp.eq.s32.totalorder %v258, %v658
        %vm675 = vcmp.eq.s32.totalorder %v258, %v659
        %vm676 = vcmp.eq.s32.totalorder %v258, %v660
        %vm677 = vcmp.eq.s32.totalorder %v258, %v661
        %vm678 = vcmp.eq.s32.totalorder %v258, %v662
        %vm679 = vcmp.eq.s32.totalorder %v258, %v663
        %vm680 = vcmp.eq.s32.totalorder %v258, %v664
        %vm681 = vcmp.eq.s32.totalorder %v258, %v665
        %vm682 = vcmp.eq.s32.totalorder %v258, %v666
        %vm683 = vcmp.eq.s32.totalorder %v258, %v667
        %vm684 = vcmp.eq.s32.totalorder %v258, %v668
        %v685 = vsel %vm669, 1, 0
        %v686 = vsel %vm670, 1, 0
        %v687 = vsel %vm671, 1, 0
        %v688 = vsel %vm672, 1, 0
        %v689 = vsel %vm673, 1, 0
        %v690 = vsel %vm674, 1, 0
        %v691 = vsel %vm675, 1, 0
        %v692 = vsel %vm676, 1, 0
        %v693 = vsel %vm677, 1, 0
        %v694 = vsel %vm678, 1, 0
        %v695 = vsel %vm679, 1, 0
        %v696 = vsel %vm680, 1, 0
        %v697 = vsel %vm681, 1, 0
        %v698 = vsel %vm682, 1, 0
        %v699 = vsel %vm683, 1, 0
        %v700 = vsel %vm684, 1, 0
        %vm701 = vcmp.eq.s32.totalorder %v291, %v653
        %vm702 = vcmp.eq.s32.totalorder %v291, %v654
        %vm703 = vcmp.eq.s32.totalorder %v291, %v655
        %vm704 = vcmp.eq.s32.totalorder %v291, %v656
        %vm705 = vcmp.eq.s32.totalorder %v291, %v657
        %vm706 = vcmp.eq.s32.totalorder %v291, %v658
        %vm707 = vcmp.eq.s32.totalorder %v291, %v659
        %vm708 = vcmp.eq.s32.totalorder %v291, %v660
        %vm709 = vcmp.eq.s32.totalorder %v291, %v661
        %vm710 = vcmp.eq.s32.totalorder %v291, %v662
        %vm711 = vcmp.eq.s32.totalorder %v291, %v663
        %vm712 = vcmp.eq.s32.totalorder %v291, %v664
        %vm713 = vcmp.eq.s32.totalorder %v291, %v665
        %vm714 = vcmp.eq.s32.totalorder %v291, %v666
        %vm715 = vcmp.eq.s32.totalorder %v291, %v667
        %vm716 = vcmp.eq.s32.totalorder %v291, %v668
        %v717 = vsel %vm701, 1, 0
        %v718 = vsel %vm702, 1, 0
        %v719 = vsel %vm703, 1, 0
        %v720 = vsel %vm704, 1, 0
        %v721 = vsel %vm705, 1, 0
        %v722 = vsel %vm706, 1, 0
        %v723 = vsel %vm707, 1, 0
        %v724 = vsel %vm708, 1, 0
        %v725 = vsel %vm709, 1, 0
        %v726 = vsel %vm710, 1, 0
        %v727 = vsel %vm711, 1, 0
        %v728 = vsel %vm712, 1, 0
        %v729 = vsel %vm713, 1, 0
        %v730 = vsel %vm714, 1, 0
        %v731 = vsel %vm715, 1, 0
        %v732 = vsel %vm716, 1, 0
        %v733 = vadd.s32 %v685, %v717
        %v734 = vadd.s32 %v686, %v718
        %v735 = vadd.s32 %v687, %v719
        %v736 = vadd.s32 %v688, %v720
        %v737 = vadd.s32 %v689, %v721
        %v738 = vadd.s32 %v690, %v722
        %v739 = vadd.s32 %v691, %v723
        %v740 = vadd.s32 %v692, %v724
        %v741 = vadd.s32 %v693, %v725
        %v742 = vadd.s32 %v694, %v726
        %v743 = vadd.s32 %v695, %v727
        %v744 = vadd.s32 %v696, %v728
        %v745 = vadd.s32 %v697, %v729
        %v746 = vadd.s32 %v698, %v730
        %v747 = vadd.s32 %v699, %v731
        %v748 = vadd.s32 %v700, %v732
        %vm749 = vcmp.eq.s32.totalorder %v340, %v653
        %vm750 = vcmp.eq.s32.totalorder %v340, %v654
        %vm751 = vcmp.eq.s32.totalorder %v340, %v655
        %vm752 = vcmp.eq.s32.totalorder %v340, %v656
        %vm753 = vcmp.eq.s32.totalorder %v340, %v657
        %vm754 = vcmp.eq.s32.totalorder %v340, %v658
        %vm755 = vcmp.eq.s32.totalorder %v340, %v659
        %vm756 = vcmp.eq.s32.totalorder %v340, %v660
        %vm757 = vcmp.eq.s32.totalorder %v340, %v661
        %vm758 = vcmp.eq.s32.totalorder %v340, %v662
        %vm759 = vcmp.eq.s32.totalorder %v340, %v663
        %vm760 = vcmp.eq.s32.totalorder %v340, %v664
        %vm761 = vcmp.eq.s32.totalorder %v340, %v665
        %vm762 = vcmp.eq.s32.totalorder %v340, %v666
        %vm763 = vcmp.eq.s32.totalorder %v340, %v667
        %vm764 = vcmp.eq.s32.totalorder %v340, %v668
        %v765 = vsel %vm749, 1, 0
        %v766 = vsel %vm750, 1, 0
        %v767 = vsel %vm751, 1, 0
        %v768 = vsel %vm752, 1, 0
        %v769 = vsel %vm753, 1, 0
        %v770 = vsel %vm754, 1, 0
        %v771 = vsel %vm755, 1, 0
        %v772 = vsel %vm756, 1, 0
        %v773 = vsel %vm757, 1, 0
        %v774 = vsel %vm758, 1, 0
        %v775 = vsel %vm759, 1, 0
        %v776 = vsel %vm760, 1, 0
        %v777 = vsel %vm761, 1, 0
        %v778 = vsel %vm762, 1, 0
        %v779 = vsel %vm763, 1, 0
        %v780 = vsel %vm764, 1, 0
        %v781 = vadd.s32 %v733, %v765
        %v782 = vadd.s32 %v734, %v766
        %v783 = vadd.s32 %v735, %v767
        %v784 = vadd.s32 %v736, %v768
        %v785 = vadd.s32 %v737, %v769
        %v786 = vadd.s32 %v738, %v770
        %v787 = vadd.s32 %v739, %v771
        %v788 = vadd.s32 %v740, %v772
        %v789 = vadd.s32 %v741, %v773
        %v790 = vadd.s32 %v742, %v774
        %v791 = vadd.s32 %v743, %v775
        %v792 = vadd.s32 %v744, %v776
        %v793 = vadd.s32 %v745, %v777
        %v794 = vadd.s32 %v746, %v778
        %v795 = vadd.s32 %v747, %v779
        %v796 = vadd.s32 %v748, %v780
        %vm797 = vcmp.eq.s32.totalorder %v389, %v653
        %vm798 = vcmp.eq.s32.totalorder %v389, %v654
        %vm799 = vcmp.eq.s32.totalorder %v389, %v655
        %vm800 = vcmp.eq.s32.totalorder %v389, %v656
        %vm801 = vcmp.eq.s32.totalorder %v389, %v657
        %vm802 = vcmp.eq.s32.totalorder %v389, %v658
        %vm803 = vcmp.eq.s32.totalorder %v389, %v659
        %vm804 = vcmp.eq.s32.totalorder %v389, %v660
        %vm805 = vcmp.eq.s32.totalorder %v389, %v661
        %vm806 = vcmp.eq.s32.totalorder %v389, %v662
        %vm807 = vcmp.eq.s32.totalorder %v389, %v663
        %vm808 = vcmp.eq.s32.totalorder %v389, %v664
        %vm809 = vcmp.eq.s32.totalorder %v389, %v665
        %vm810 = vcmp.eq.s32.totalorder %v389, %v666
        %vm811 = vcmp.eq.s32.totalorder %v389, %v667
        %vm812 = vcmp.eq.s32.totalorder %v389, %v668
        %v813 = vsel %vm797, 1, 0
        %v814 = vsel %vm798, 1, 0
        %v815 = vsel %vm799, 1, 0
        %v816 = vsel %vm800, 1, 0
        %v817 = vsel %vm801, 1, 0
        %v818 = vsel %vm802, 1, 0
        %v819 = vsel %vm803, 1, 0
        %v820 = vsel %vm804, 1, 0
        %v821 = vsel %vm805, 1, 0
        %v822 = vsel %vm806, 1, 0
        %v823 = vsel %vm807, 1, 0
        %v824 = vsel %vm808, 1, 0
        %v825 = vsel %vm809, 1, 0
        %v826 = vsel %vm810, 1, 0
        %v827 = vsel %vm811, 1, 0
        %v828 = vsel %vm812, 1, 0
        %v829 = vadd.s32 %v781, %v813
        %v830 = vadd.s32 %v782, %v814
        %v831 = vadd.s32 %v783, %v815
        %v832 = vadd.s32 %v784, %v816
        %v833 = vadd.s32 %v785, %v817
        %v834 = vadd.s32 %v786, %v818
        %v835 = vadd.s32 %v787, %v819
        %v836 = vadd.s32 %v788, %v820
        %v837 = vadd.s32 %v789, %v821
        %v838 = vadd.s32 %v790, %v822
        %v839 = vadd.s32 %v791, %v823
        %v840 = vadd.s32 %v792, %v824
        %v841 = vadd.s32 %v793, %v825
        %v842 = vadd.s32 %v794, %v826
        %v843 = vadd.s32 %v795, %v827
        %v844 = vadd.s32 %v796, %v828
        %vm845 = vcmp.eq.s32.totalorder %v438, %v653
        %vm846 = vcmp.eq.s32.totalorder %v438, %v654
        %vm847 = vcmp.eq.s32.totalorder %v438, %v655
        %vm848 = vcmp.eq.s32.totalorder %v438, %v656
        %vm849 = vcmp.eq.s32.totalorder %v438, %v657
        %vm850 = vcmp.eq.s32.totalorder %v438, %v658
        %vm851 = vcmp.eq.s32.totalorder %v438, %v659
        %vm852 = vcmp.eq.s32.totalorder %v438, %v660
        %vm853 = vcmp.eq.s32.totalorder %v438, %v661
        %vm854 = vcmp.eq.s32.totalorder %v438, %v662
        %vm855 = vcmp.eq.s32.totalorder %v438, %v663
        %vm856 = vcmp.eq.s32.totalorder %v438, %v664
        %vm857 = vcmp.eq.s32.totalorder %v438, %v665
        %vm858 = vcmp.eq.s32.totalorder %v438, %v666
        %vm859 = vcmp.eq.s32.totalorder %v438, %v667
        %vm860 = vcmp.eq.s32.totalorder %v438, %v668
        %v861 = vsel %vm845, 1, 0
        %v862 = vsel %vm846, 1, 0
        %v863 = vsel %vm847, 1, 0
        %v864 = vsel %vm848, 1, 0
        %v865 = vsel %vm849, 1, 0
        %v866 = vsel %vm850, 1, 0
        %v867 = vsel %vm851, 1, 0
        %v868 = vsel %vm852, 1, 0
        %v869 = vsel %vm853, 1, 0
        %v870 = vsel %vm854, 1, 0
        %v871 = vsel %vm855, 1, 0
        %v872 = vsel %vm856, 1, 0
        %v873 = vsel %vm857, 1, 0
        %v874 = vsel %vm858, 1, 0
        %v875 = vsel %vm859, 1, 0
        %v876 = vsel %vm860, 1, 0
        %v877 = vadd.s32 %v829, %v861
        %v878 = vadd.s32 %v830, %v862
        %v879 = vadd.s32 %v831, %v863
        %v880 = vadd.s32 %v832, %v864
        %v881 = vadd.s32 %v833, %v865
        %v882 = vadd.s32 %v834, %v866
        %v883 = vadd.s32 %v835, %v867
        %v884 = vadd.s32 %v836, %v868
        %v885 = vadd.s32 %v837, %v869
        %v886 = vadd.s32 %v838, %v870
        %v887 = vadd.s32 %v839, %v871
        %v888 = vadd.s32 %v840, %v872
        %v889 = vadd.s32 %v841, %v873
        %v890 = vadd.s32 %v842, %v874
        %v891 = vadd.s32 %v843, %v875
        %v892 = vadd.s32 %v844, %v876
        %vm893 = vcmp.eq.s32.totalorder %v487, %v653
        %vm894 = vcmp.eq.s32.totalorder %v487, %v654
        %vm895 = vcmp.eq.s32.totalorder %v487, %v655
        %vm896 = vcmp.eq.s32.totalorder %v487, %v656
        %vm897 = vcmp.eq.s32.totalorder %v487, %v657
        %vm898 = vcmp.eq.s32.totalorder %v487, %v658
        %vm899 = vcmp.eq.s32.totalorder %v487, %v659
        %vm900 = vcmp.eq.s32.totalorder %v487, %v660
        %vm901 = vcmp.eq.s32.totalorder %v487, %v661
        %vm902 = vcmp.eq.s32.totalorder %v487, %v662
        %vm903 = vcmp.eq.s32.totalorder %v487, %v663
        %vm904 = vcmp.eq.s32.totalorder %v487, %v664
        %vm905 = vcmp.eq.s32.totalorder %v487, %v665
        %vm906 = vcmp.eq.s32.totalorder %v487, %v666
        %vm907 = vcmp.eq.s32.totalorder %v487, %v667
        %vm908 = vcmp.eq.s32.totalorder %v487, %v668
        %v909 = vsel %vm893, 1, 0
        %v910 = vsel %vm894, 1, 0
        %v911 = vsel %vm895, 1, 0
        %v912 = vsel %vm896, 1, 0
        %v913 = vsel %vm897, 1, 0
        %v914 = vsel %vm898, 1, 0
        %v915 = vsel %vm899, 1, 0
        %v916 = vsel %vm900, 1, 0
        %v917 = vsel %vm901, 1, 0
        %v918 = vsel %vm902, 1, 0
        %v919 = vsel %vm903, 1, 0
        %v920 = vsel %vm904, 1, 0
        %v921 = vsel %vm905, 1, 0
        %v922 = vsel %vm906, 1, 0
        %v923 = vsel %vm907, 1, 0
        %v924 = vsel %vm908, 1, 0
        %v925 = vadd.s32 %v877, %v909
        %v926 = vadd.s32 %v878, %v910
        %v927 = vadd.s32 %v879, %v911
        %v928 = vadd.s32 %v880, %v912
        %v929 = vadd.s32 %v881, %v913
        %v930 = vadd.s32 %v882, %v914
        %v931 = vadd.s32 %v883, %v915
        %v932 = vadd.s32 %v884, %v916
        %v933 = vadd.s32 %v885, %v917
        %v934 = vadd.s32 %v886, %v918
        %v935 = vadd.s32 %v887, %v919
        %v936 = vadd.s32 %v888, %v920
        %v937 = vadd.s32 %v889, %v921
        %v938 = vadd.s32 %v890, %v922
        %v939 = vadd.s32 %v891, %v923
        %v940 = vadd.s32 %v892, %v924
        %vm941 = vcmp.eq.s32.totalorder %v536, %v653
        %vm942 = vcmp.eq.s32.totalorder %v536, %v654
        %vm943 = vcmp.eq.s32.totalorder %v536, %v655
        %vm944 = vcmp.eq.s32.totalorder %v536, %v656
        %vm945 = vcmp.eq.s32.totalorder %v536, %v657
        %vm946 = vcmp.eq.s32.totalorder %v536, %v658
        %vm947 = vcmp.eq.s32.totalorder %v536, %v659
        %vm948 = vcmp.eq.s32.totalorder %v536, %v660
        %vm949 = vcmp.eq.s32.totalorder %v536, %v661
        %vm950 = vcmp.eq.s32.totalorder %v536, %v662
        %vm951 = vcmp.eq.s32.totalorder %v536, %v663
        %vm952 = vcmp.eq.s32.totalorder %v536, %v664
        %vm953 = vcmp.eq.s32.totalorder %v536, %v665
        %vm954 = vcmp.eq.s32.totalorder %v536, %v666
        %vm955 = vcmp.eq.s32.totalorder %v536, %v667
        %vm956 = vcmp.eq.s32.totalorder %v536, %v668
        %v957 = vsel %vm941, 1, 0
        %v958 = vsel %vm942, 1, 0
        %v959 = vsel %vm943, 1, 0
        %v960 = vsel %vm944, 1, 0
        %v961 = vsel %vm945, 1, 0
        %v962 = vsel %vm946, 1, 0
        %v963 = vsel %vm947, 1, 0
        %v964 = vsel %vm948, 1, 0
        %v965 = vsel %vm949, 1, 0
        %v966 = vsel %vm950, 1, 0
        %v967 = vsel %vm951, 1, 0
        %v968 = vsel %vm952, 1, 0
        %v969 = vsel %vm953, 1, 0
        %v970 = vsel %vm954, 1, 0
        %v971 = vsel %vm955, 1, 0
        %v972 = vsel %vm956, 1, 0
        %v973 = vadd.s32 %v925, %v957
        %v974 = vadd.s32 %v926, %v958
        %v975 = vadd.s32 %v927, %v959
        %v976 = vadd.s32 %v928, %v960
        %v977 = vadd.s32 %v929, %v961
        %v978 = vadd.s32 %v930, %v962
        %v979 = vadd.s32 %v931, %v963
        %v980 = vadd.s32 %v932, %v964
        %v981 = vadd.s32 %v933, %v965
        %v982 = vadd.s32 %v934, %v966
        %v983 = vadd.s32 %v935, %v967
        %v984 = vadd.s32 %v936, %v968
        %v985 = vadd.s32 %v937, %v969
        %v986 = vadd.s32 %v938, %v970
        %v987 = vadd.s32 %v939, %v971
        %v988 = vadd.s32 %v940, %v972
        %vm989 = vcmp.eq.s32.totalorder %v585, %v653
        %vm990 = vcmp.eq.s32.totalorder %v585, %v654
        %vm991 = vcmp.eq.s32.totalorder %v585, %v655
        %vm992 = vcmp.eq.s32.totalorder %v585, %v656
        %vm993 = vcmp.eq.s32.totalorder %v585, %v657
        %vm994 = vcmp.eq.s32.totalorder %v585, %v658
        %vm995 = vcmp.eq.s32.totalorder %v585, %v659
        %vm996 = vcmp.eq.s32.totalorder %v585, %v660
        %vm997 = vcmp.eq.s32.totalorder %v585, %v661
        %vm998 = vcmp.eq.s32.totalorder %v585, %v662
        %vm999 = vcmp.eq.s32.totalorder %v585, %v663
        %vm1000 = vcmp.eq.s32.totalorder %v585, %v664
        %vm1001 = vcmp.eq.s32.totalorder %v585, %v665
        %vm1002 = vcmp.eq.s32.totalorder %v585, %v666
        %vm1003 = vcmp.eq.s32.totalorder %v585, %v667
        %vm1004 = vcmp.eq.s32.totalorder %v585, %v668
        %v1005 = vsel %vm989, 1, 0
        %v1006 = vsel %vm990, 1, 0
        %v1007 = vsel %vm991, 1, 0
        %v1008 = vsel %vm992, 1, 0
        %v1009 = vsel %vm993, 1, 0
        %v1010 = vsel %vm994, 1, 0
        %v1011 = vsel %vm995, 1, 0
        %v1012 = vsel %vm996, 1, 0
        %v1013 = vsel %vm997, 1, 0
        %v1014 = vsel %vm998, 1, 0
        %v1015 = vsel %vm999, 1, 0
        %v1016 = vsel %vm1000, 1, 0
        %v1017 = vsel %vm1001, 1, 0
        %v1018 = vsel %vm1002, 1, 0
        %v1019 = vsel %vm1003, 1, 0
        %v1020 = vsel %vm1004, 1, 0
        %v1021 = vadd.s32 %v973, %v1005
        %v1022 = vadd.s32 %v974, %v1006
        %v1023 = vadd.s32 %v975, %v1007
        %v1024 = vadd.s32 %v976, %v1008
        %v1025 = vadd.s32 %v977, %v1009
        %v1026 = vadd.s32 %v978, %v1010
        %v1027 = vadd.s32 %v979, %v1011
        %v1028 = vadd.s32 %v980, %v1012
        %v1029 = vadd.s32 %v981, %v1013
        %v1030 = vadd.s32 %v982, %v1014
        %v1031 = vadd.s32 %v983, %v1015
        %v1032 = vadd.s32 %v984, %v1016
        %v1033 = vadd.s32 %v985, %v1017
        %v1034 = vadd.s32 %v986, %v1018
        %v1035 = vadd.s32 %v987, %v1019
        %v1036 = vadd.s32 %v988, %v1020
        %v1037 = vld [vmem:[%s197 + $0x1] sm:$0x1]
        %v1038 = vcvt.s32.f32 %v1021
        %v1039 = vcvt.s32.f32 %v1022
        %v1040 = vcvt.s32.f32 %v1023
        %v1041 = vcvt.s32.f32 %v1024
        %v1042 = vcvt.s32.f32 %v1025
        %v1043 = vcvt.s32.f32 %v1026
        %v1044 = vcvt.s32.f32 %v1027
        %v1045 = vcvt.s32.f32 %v1028
        %v1046 = vcvt.s32.f32 %v1029
        %v1047 = vcvt.s32.f32 %v1030
        %v1048 = vcvt.s32.f32 %v1031
        %v1049 = vcvt.s32.f32 %v1032
        %v1050 = vcvt.s32.f32 %v1033
        %v1051 = vcvt.s32.f32 %v1034
        %v1052 = vcvt.s32.f32 %v1035
        %v1053 = vcvt.s32.f32 %v1036
        %1054 = vmatpush.msra.mxu0 %v1053
        %1055 = vmatpush.msra.mxu0 %v1052
        %1056 = vmatpush.msra.mxu0 %v1051
        %1057 = vmatpush.msra.mxu0 %v1050
        %1058 = vmatpush.msra.mxu0 %v1049
        %1059 = vmatpush.msra.mxu0 %v1048
        %1060 = vmatpush.msra.mxu0 %v1047
        %1061 = vmatpush.msra.mxu0 %v1046
        %1062 = vmatpush.msra.mxu0 %v1045
        %1063 = vmatpush.msra.mxu0 %v1044
        %1064 = vmatpush.msra.mxu0 %v1043
        %1065 = vmatpush.msra.mxu0 %v1042
        %1066 = vmatpush.msra.mxu0 %v1041
        %1067 = vmatpush.msra.mxu0 %v1040
        %1068 = vmatpush.msra.mxu0 %v1039
        %1069 = vmatpush.msra.mxu0 %v1038
        %1070 = vmatmul.f32.gmra.mxu0 %v1037
        %v1071 = vpop.f32.mrf.mxu0
        %v1072 = vadd.f32 0.0, %v1071
        %1073 = vdwg.mxu0
        %1074 = vmatpush.msra.mxu0 %v650
        %1075 = vmatpush.msra.mxu0 %v649
        %1076 = vmatpush.msra.mxu0 %v648
        %1077 = vmatpush.msra.mxu0 %v647
        %1078 = vmatpush.msra.mxu0 %v646
        %1079 = vmatpush.msra.mxu0 %v645
        %1080 = vmatpush.msra.mxu0 %v644
        %1081 = vmatpush.msra.mxu0 %v643
        %1082 = vmatpush.msra.mxu0 %v642
        %1083 = vmatpush.msra.mxu0 %v641
        %1084 = vmatpush.msra.mxu0 %v640
        %1085 = vmatpush.msra.mxu0 %v639
        %1086 = vmatpush.msra.mxu0 %v638
        %1087 = vmatpush.msra.mxu0 %v637
        %1088 = vmatpush.msra.mxu0 %v636
        %1089 = vmatpush.msra.mxu0 %v635
        %1090 = vmatmul.f32.gmra.mxu0 %v634
        %v1091 = vpop.f32.mrf.mxu0
        %v1092 = vadd.f32 %v1072, %v1091
        %1093 = vdwg.mxu0
        %s1094 = sadd.s32 %s223, 256
        %v1095 = vstv %s1094
        %v1096 = vadd.s32 %v225, %v1095
        %v1097 = vadd.s32 %v226, %v1095
        %v1098 = vadd.s32 %v227, %v1095
        %v1099 = vadd.s32 %v228, %v1095
        %v1100 = vadd.s32 %v229, %v1095
        %v1101 = vadd.s32 %v230, %v1095
        %v1102 = vadd.s32 %v231, %v1095
        %v1103 = vadd.s32 %v232, %v1095
        %v1104 = vadd.s32 %v233, %v1095
        %v1105 = vadd.s32 %v234, %v1095
        %v1106 = vadd.s32 %v235, %v1095
        %v1107 = vadd.s32 %v236, %v1095
        %v1108 = vadd.s32 %v237, %v1095
        %v1109 = vadd.s32 %v238, %v1095
        %v1110 = vadd.s32 %v239, %v1095
        %v1111 = vadd.s32 %v240, %v1095
        %vm1112 = vcmp.eq.s32.totalorder %v258, %v1096
        %vm1113 = vcmp.eq.s32.totalorder %v258, %v1097
        %vm1114 = vcmp.eq.s32.totalorder %v258, %v1098
        %vm1115 = vcmp.eq.s32.totalorder %v258, %v1099
        %vm1116 = vcmp.eq.s32.totalorder %v258, %v1100
        %vm1117 = vcmp.eq.s32.totalorder %v258, %v1101
        %vm1118 = vcmp.eq.s32.totalorder %v258, %v1102
        %vm1119 = vcmp.eq.s32.totalorder %v258, %v1103
        %vm1120 = vcmp.eq.s32.totalorder %v258, %v1104
        %vm1121 = vcmp.eq.s32.totalorder %v258, %v1105
        %vm1122 = vcmp.eq.s32.totalorder %v258, %v1106
        %vm1123 = vcmp.eq.s32.totalorder %v258, %v1107
        %vm1124 = vcmp.eq.s32.totalorder %v258, %v1108
        %vm1125 = vcmp.eq.s32.totalorder %v258, %v1109
        %vm1126 = vcmp.eq.s32.totalorder %v258, %v1110
        %vm1127 = vcmp.eq.s32.totalorder %v258, %v1111
        %v1128 = vsel %vm1112, 1, 0
        %v1129 = vsel %vm1113, 1, 0
        %v1130 = vsel %vm1114, 1, 0
        %v1131 = vsel %vm1115, 1, 0
        %v1132 = vsel %vm1116, 1, 0
        %v1133 = vsel %vm1117, 1, 0
        %v1134 = vsel %vm1118, 1, 0
        %v1135 = vsel %vm1119, 1, 0
        %v1136 = vsel %vm1120, 1, 0
        %v1137 = vsel %vm1121, 1, 0
        %v1138 = vsel %vm1122, 1, 0
        %v1139 = vsel %vm1123, 1, 0
        %v1140 = vsel %vm1124, 1, 0
        %v1141 = vsel %vm1125, 1, 0
        %v1142 = vsel %vm1126, 1, 0
        %v1143 = vsel %vm1127, 1, 0
        %vm1144 = vcmp.eq.s32.totalorder %v291, %v1096
        %vm1145 = vcmp.eq.s32.totalorder %v291, %v1097
        %vm1146 = vcmp.eq.s32.totalorder %v291, %v1098
        %vm1147 = vcmp.eq.s32.totalorder %v291, %v1099
        %vm1148 = vcmp.eq.s32.totalorder %v291, %v1100
        %vm1149 = vcmp.eq.s32.totalorder %v291, %v1101
        %vm1150 = vcmp.eq.s32.totalorder %v291, %v1102
        %vm1151 = vcmp.eq.s32.totalorder %v291, %v1103
        %vm1152 = vcmp.eq.s32.totalorder %v291, %v1104
        %vm1153 = vcmp.eq.s32.totalorder %v291, %v1105
        %vm1154 = vcmp.eq.s32.totalorder %v291, %v1106
        %vm1155 = vcmp.eq.s32.totalorder %v291, %v1107
        %vm1156 = vcmp.eq.s32.totalorder %v291, %v1108
        %vm1157 = vcmp.eq.s32.totalorder %v291, %v1109
        %vm1158 = vcmp.eq.s32.totalorder %v291, %v1110
        %vm1159 = vcmp.eq.s32.totalorder %v291, %v1111
        %v1160 = vsel %vm1144, 1, 0
        %v1161 = vsel %vm1145, 1, 0
        %v1162 = vsel %vm1146, 1, 0
        %v1163 = vsel %vm1147, 1, 0
        %v1164 = vsel %vm1148, 1, 0
        %v1165 = vsel %vm1149, 1, 0
        %v1166 = vsel %vm1150, 1, 0
        %v1167 = vsel %vm1151, 1, 0
        %v1168 = vsel %vm1152, 1, 0
        %v1169 = vsel %vm1153, 1, 0
        %v1170 = vsel %vm1154, 1, 0
        %v1171 = vsel %vm1155, 1, 0
        %v1172 = vsel %vm1156, 1, 0
        %v1173 = vsel %vm1157, 1, 0
        %v1174 = vsel %vm1158, 1, 0
        %v1175 = vsel %vm1159, 1, 0
        %v1176 = vadd.s32 %v1128, %v1160
        %v1177 = vadd.s32 %v1129, %v1161
        %v1178 = vadd.s32 %v1130, %v1162
        %v1179 = vadd.s32 %v1131, %v1163
        %v1180 = vadd.s32 %v1132, %v1164
        %v1181 = vadd.s32 %v1133, %v1165
        %v1182 = vadd.s32 %v1134, %v1166
        %v1183 = vadd.s32 %v1135, %v1167
        %v1184 = vadd.s32 %v1136, %v1168
        %v1185 = vadd.s32 %v1137, %v1169
        %v1186 = vadd.s32 %v1138, %v1170
        %v1187 = vadd.s32 %v1139, %v1171
        %v1188 = vadd.s32 %v1140, %v1172
        %v1189 = vadd.s32 %v1141, %v1173
        %v1190 = vadd.s32 %v1142, %v1174
        %v1191 = vadd.s32 %v1143, %v1175
        %vm1192 = vcmp.eq.s32.totalorder %v340, %v1096
        %vm1193 = vcmp.eq.s32.totalorder %v340, %v1097
        %vm1194 = vcmp.eq.s32.totalorder %v340, %v1098
        %vm1195 = vcmp.eq.s32.totalorder %v340, %v1099
        %vm1196 = vcmp.eq.s32.totalorder %v340, %v1100
        %vm1197 = vcmp.eq.s32.totalorder %v340, %v1101
        %vm1198 = vcmp.eq.s32.totalorder %v340, %v1102
        %vm1199 = vcmp.eq.s32.totalorder %v340, %v1103
        %vm1200 = vcmp.eq.s32.totalorder %v340, %v1104
        %vm1201 = vcmp.eq.s32.totalorder %v340, %v1105
        %vm1202 = vcmp.eq.s32.totalorder %v340, %v1106
        %vm1203 = vcmp.eq.s32.totalorder %v340, %v1107
        %vm1204 = vcmp.eq.s32.totalorder %v340, %v1108
        %vm1205 = vcmp.eq.s32.totalorder %v340, %v1109
        %vm1206 = vcmp.eq.s32.totalorder %v340, %v1110
        %vm1207 = vcmp.eq.s32.totalorder %v340, %v1111
        %v1208 = vsel %vm1192, 1, 0
        %v1209 = vsel %vm1193, 1, 0
        %v1210 = vsel %vm1194, 1, 0
        %v1211 = vsel %vm1195, 1, 0
        %v1212 = vsel %vm1196, 1, 0
        %v1213 = vsel %vm1197, 1, 0
        %v1214 = vsel %vm1198, 1, 0
        %v1215 = vsel %vm1199, 1, 0
        %v1216 = vsel %vm1200, 1, 0
        %v1217 = vsel %vm1201, 1, 0
        %v1218 = vsel %vm1202, 1, 0
        %v1219 = vsel %vm1203, 1, 0
        %v1220 = vsel %vm1204, 1, 0
        %v1221 = vsel %vm1205, 1, 0
        %v1222 = vsel %vm1206, 1, 0
        %v1223 = vsel %vm1207, 1, 0
        %v1224 = vadd.s32 %v1176, %v1208
        %v1225 = vadd.s32 %v1177, %v1209
        %v1226 = vadd.s32 %v1178, %v1210
        %v1227 = vadd.s32 %v1179, %v1211
        %v1228 = vadd.s32 %v1180, %v1212
        %v1229 = vadd.s32 %v1181, %v1213
        %v1230 = vadd.s32 %v1182, %v1214
        %v1231 = vadd.s32 %v1183, %v1215
        %v1232 = vadd.s32 %v1184, %v1216
        %v1233 = vadd.s32 %v1185, %v1217
        %v1234 = vadd.s32 %v1186, %v1218
        %v1235 = vadd.s32 %v1187, %v1219
        %v1236 = vadd.s32 %v1188, %v1220
        %v1237 = vadd.s32 %v1189, %v1221
        %v1238 = vadd.s32 %v1190, %v1222
        %v1239 = vadd.s32 %v1191, %v1223
        %vm1240 = vcmp.eq.s32.totalorder %v389, %v1096
        %vm1241 = vcmp.eq.s32.totalorder %v389, %v1097
        %vm1242 = vcmp.eq.s32.totalorder %v389, %v1098
        %vm1243 = vcmp.eq.s32.totalorder %v389, %v1099
        %vm1244 = vcmp.eq.s32.totalorder %v389, %v1100
        %vm1245 = vcmp.eq.s32.totalorder %v389, %v1101
        %vm1246 = vcmp.eq.s32.totalorder %v389, %v1102
        %vm1247 = vcmp.eq.s32.totalorder %v389, %v1103
        %vm1248 = vcmp.eq.s32.totalorder %v389, %v1104
        %vm1249 = vcmp.eq.s32.totalorder %v389, %v1105
        %vm1250 = vcmp.eq.s32.totalorder %v389, %v1106
        %vm1251 = vcmp.eq.s32.totalorder %v389, %v1107
        %vm1252 = vcmp.eq.s32.totalorder %v389, %v1108
        %vm1253 = vcmp.eq.s32.totalorder %v389, %v1109
        %vm1254 = vcmp.eq.s32.totalorder %v389, %v1110
        %vm1255 = vcmp.eq.s32.totalorder %v389, %v1111
        %v1256 = vsel %vm1240, 1, 0
        %v1257 = vsel %vm1241, 1, 0
        %v1258 = vsel %vm1242, 1, 0
        %v1259 = vsel %vm1243, 1, 0
        %v1260 = vsel %vm1244, 1, 0
        %v1261 = vsel %vm1245, 1, 0
        %v1262 = vsel %vm1246, 1, 0
        %v1263 = vsel %vm1247, 1, 0
        %v1264 = vsel %vm1248, 1, 0
        %v1265 = vsel %vm1249, 1, 0
        %v1266 = vsel %vm1250, 1, 0
        %v1267 = vsel %vm1251, 1, 0
        %v1268 = vsel %vm1252, 1, 0
        %v1269 = vsel %vm1253, 1, 0
        %v1270 = vsel %vm1254, 1, 0
        %v1271 = vsel %vm1255, 1, 0
        %v1272 = vadd.s32 %v1224, %v1256
        %v1273 = vadd.s32 %v1225, %v1257
        %v1274 = vadd.s32 %v1226, %v1258
        %v1275 = vadd.s32 %v1227, %v1259
        %v1276 = vadd.s32 %v1228, %v1260
        %v1277 = vadd.s32 %v1229, %v1261
        %v1278 = vadd.s32 %v1230, %v1262
        %v1279 = vadd.s32 %v1231, %v1263
        %v1280 = vadd.s32 %v1232, %v1264
        %v1281 = vadd.s32 %v1233, %v1265
        %v1282 = vadd.s32 %v1234, %v1266
        %v1283 = vadd.s32 %v1235, %v1267
        %v1284 = vadd.s32 %v1236, %v1268
        %v1285 = vadd.s32 %v1237, %v1269
        %v1286 = vadd.s32 %v1238, %v1270
        %v1287 = vadd.s32 %v1239, %v1271
        %vm1288 = vcmp.eq.s32.totalorder %v438, %v1096
        %vm1289 = vcmp.eq.s32.totalorder %v438, %v1097
        %vm1290 = vcmp.eq.s32.totalorder %v438, %v1098
        %vm1291 = vcmp.eq.s32.totalorder %v438, %v1099
        %vm1292 = vcmp.eq.s32.totalorder %v438, %v1100
        %vm1293 = vcmp.eq.s32.totalorder %v438, %v1101
        %vm1294 = vcmp.eq.s32.totalorder %v438, %v1102
        %vm1295 = vcmp.eq.s32.totalorder %v438, %v1103
        %vm1296 = vcmp.eq.s32.totalorder %v438, %v1104
        %vm1297 = vcmp.eq.s32.totalorder %v438, %v1105
        %vm1298 = vcmp.eq.s32.totalorder %v438, %v1106
        %vm1299 = vcmp.eq.s32.totalorder %v438, %v1107
        %vm1300 = vcmp.eq.s32.totalorder %v438, %v1108
        %vm1301 = vcmp.eq.s32.totalorder %v438, %v1109
        %vm1302 = vcmp.eq.s32.totalorder %v438, %v1110
        %vm1303 = vcmp.eq.s32.totalorder %v438, %v1111
        %v1304 = vsel %vm1288, 1, 0
        %v1305 = vsel %vm1289, 1, 0
        %v1306 = vsel %vm1290, 1, 0
        %v1307 = vsel %vm1291, 1, 0
        %v1308 = vsel %vm1292, 1, 0
        %v1309 = vsel %vm1293, 1, 0
        %v1310 = vsel %vm1294, 1, 0
        %v1311 = vsel %vm1295, 1, 0
        %v1312 = vsel %vm1296, 1, 0
        %v1313 = vsel %vm1297, 1, 0
        %v1314 = vsel %vm1298, 1, 0
        %v1315 = vsel %vm1299, 1, 0
        %v1316 = vsel %vm1300, 1, 0
        %v1317 = vsel %vm1301, 1, 0
        %v1318 = vsel %vm1302, 1, 0
        %v1319 = vsel %vm1303, 1, 0
        %v1320 = vadd.s32 %v1272, %v1304
        %v1321 = vadd.s32 %v1273, %v1305
        %v1322 = vadd.s32 %v1274, %v1306
        %v1323 = vadd.s32 %v1275, %v1307
        %v1324 = vadd.s32 %v1276, %v1308
        %v1325 = vadd.s32 %v1277, %v1309
        %v1326 = vadd.s32 %v1278, %v1310
        %v1327 = vadd.s32 %v1279, %v1311
        %v1328 = vadd.s32 %v1280, %v1312
        %v1329 = vadd.s32 %v1281, %v1313
        %v1330 = vadd.s32 %v1282, %v1314
        %v1331 = vadd.s32 %v1283, %v1315
        %v1332 = vadd.s32 %v1284, %v1316
        %v1333 = vadd.s32 %v1285, %v1317
        %v1334 = vadd.s32 %v1286, %v1318
        %v1335 = vadd.s32 %v1287, %v1319
        %vm1336 = vcmp.eq.s32.totalorder %v487, %v1096
        %vm1337 = vcmp.eq.s32.totalorder %v487, %v1097
        %vm1338 = vcmp.eq.s32.totalorder %v487, %v1098
        %vm1339 = vcmp.eq.s32.totalorder %v487, %v1099
        %vm1340 = vcmp.eq.s32.totalorder %v487, %v1100
        %vm1341 = vcmp.eq.s32.totalorder %v487, %v1101
        %vm1342 = vcmp.eq.s32.totalorder %v487, %v1102
        %vm1343 = vcmp.eq.s32.totalorder %v487, %v1103
        %vm1344 = vcmp.eq.s32.totalorder %v487, %v1104
        %vm1345 = vcmp.eq.s32.totalorder %v487, %v1105
        %vm1346 = vcmp.eq.s32.totalorder %v487, %v1106
        %vm1347 = vcmp.eq.s32.totalorder %v487, %v1107
        %vm1348 = vcmp.eq.s32.totalorder %v487, %v1108
        %vm1349 = vcmp.eq.s32.totalorder %v487, %v1109
        %vm1350 = vcmp.eq.s32.totalorder %v487, %v1110
        %vm1351 = vcmp.eq.s32.totalorder %v487, %v1111
        %v1352 = vsel %vm1336, 1, 0
        %v1353 = vsel %vm1337, 1, 0
        %v1354 = vsel %vm1338, 1, 0
        %v1355 = vsel %vm1339, 1, 0
        %v1356 = vsel %vm1340, 1, 0
        %v1357 = vsel %vm1341, 1, 0
        %v1358 = vsel %vm1342, 1, 0
        %v1359 = vsel %vm1343, 1, 0
        %v1360 = vsel %vm1344, 1, 0
        %v1361 = vsel %vm1345, 1, 0
        %v1362 = vsel %vm1346, 1, 0
        %v1363 = vsel %vm1347, 1, 0
        %v1364 = vsel %vm1348, 1, 0
        %v1365 = vsel %vm1349, 1, 0
        %v1366 = vsel %vm1350, 1, 0
        %v1367 = vsel %vm1351, 1, 0
        %v1368 = vadd.s32 %v1320, %v1352
        %v1369 = vadd.s32 %v1321, %v1353
        %v1370 = vadd.s32 %v1322, %v1354
        %v1371 = vadd.s32 %v1323, %v1355
        %v1372 = vadd.s32 %v1324, %v1356
        %v1373 = vadd.s32 %v1325, %v1357
        %v1374 = vadd.s32 %v1326, %v1358
        %v1375 = vadd.s32 %v1327, %v1359
        %v1376 = vadd.s32 %v1328, %v1360
        %v1377 = vadd.s32 %v1329, %v1361
        %v1378 = vadd.s32 %v1330, %v1362
        %v1379 = vadd.s32 %v1331, %v1363
        %v1380 = vadd.s32 %v1332, %v1364
        %v1381 = vadd.s32 %v1333, %v1365
        %v1382 = vadd.s32 %v1334, %v1366
        %v1383 = vadd.s32 %v1335, %v1367
        %vm1384 = vcmp.eq.s32.totalorder %v536, %v1096
        %vm1385 = vcmp.eq.s32.totalorder %v536, %v1097
        %vm1386 = vcmp.eq.s32.totalorder %v536, %v1098
        %vm1387 = vcmp.eq.s32.totalorder %v536, %v1099
        %vm1388 = vcmp.eq.s32.totalorder %v536, %v1100
        %vm1389 = vcmp.eq.s32.totalorder %v536, %v1101
        %vm1390 = vcmp.eq.s32.totalorder %v536, %v1102
        %vm1391 = vcmp.eq.s32.totalorder %v536, %v1103
        %vm1392 = vcmp.eq.s32.totalorder %v536, %v1104
        %vm1393 = vcmp.eq.s32.totalorder %v536, %v1105
        %vm1394 = vcmp.eq.s32.totalorder %v536, %v1106
        %vm1395 = vcmp.eq.s32.totalorder %v536, %v1107
        %vm1396 = vcmp.eq.s32.totalorder %v536, %v1108
        %vm1397 = vcmp.eq.s32.totalorder %v536, %v1109
        %vm1398 = vcmp.eq.s32.totalorder %v536, %v1110
        %vm1399 = vcmp.eq.s32.totalorder %v536, %v1111
        %v1400 = vsel %vm1384, 1, 0
        %v1401 = vsel %vm1385, 1, 0
        %v1402 = vsel %vm1386, 1, 0
        %v1403 = vsel %vm1387, 1, 0
        %v1404 = vsel %vm1388, 1, 0
        %v1405 = vsel %vm1389, 1, 0
        %v1406 = vsel %vm1390, 1, 0
        %v1407 = vsel %vm1391, 1, 0
        %v1408 = vsel %vm1392, 1, 0
        %v1409 = vsel %vm1393, 1, 0
        %v1410 = vsel %vm1394, 1, 0
        %v1411 = vsel %vm1395, 1, 0
        %v1412 = vsel %vm1396, 1, 0
        %v1413 = vsel %vm1397, 1, 0
        %v1414 = vsel %vm1398, 1, 0
        %v1415 = vsel %vm1399, 1, 0
        %v1416 = vadd.s32 %v1368, %v1400
        %v1417 = vadd.s32 %v1369, %v1401
        %v1418 = vadd.s32 %v1370, %v1402
        %v1419 = vadd.s32 %v1371, %v1403
        %v1420 = vadd.s32 %v1372, %v1404
        %v1421 = vadd.s32 %v1373, %v1405
        %v1422 = vadd.s32 %v1374, %v1406
        %v1423 = vadd.s32 %v1375, %v1407
        %v1424 = vadd.s32 %v1376, %v1408
        %v1425 = vadd.s32 %v1377, %v1409
        %v1426 = vadd.s32 %v1378, %v1410
        %v1427 = vadd.s32 %v1379, %v1411
        %v1428 = vadd.s32 %v1380, %v1412
        %v1429 = vadd.s32 %v1381, %v1413
        %v1430 = vadd.s32 %v1382, %v1414
        %v1431 = vadd.s32 %v1383, %v1415
        %vm1432 = vcmp.eq.s32.totalorder %v585, %v1096
        %vm1433 = vcmp.eq.s32.totalorder %v585, %v1097
        %vm1434 = vcmp.eq.s32.totalorder %v585, %v1098
        %vm1435 = vcmp.eq.s32.totalorder %v585, %v1099
        %vm1436 = vcmp.eq.s32.totalorder %v585, %v1100
        %vm1437 = vcmp.eq.s32.totalorder %v585, %v1101
        %vm1438 = vcmp.eq.s32.totalorder %v585, %v1102
        %vm1439 = vcmp.eq.s32.totalorder %v585, %v1103
        %vm1440 = vcmp.eq.s32.totalorder %v585, %v1104
        %vm1441 = vcmp.eq.s32.totalorder %v585, %v1105
        %vm1442 = vcmp.eq.s32.totalorder %v585, %v1106
        %vm1443 = vcmp.eq.s32.totalorder %v585, %v1107
        %vm1444 = vcmp.eq.s32.totalorder %v585, %v1108
        %vm1445 = vcmp.eq.s32.totalorder %v585, %v1109
        %vm1446 = vcmp.eq.s32.totalorder %v585, %v1110
        %vm1447 = vcmp.eq.s32.totalorder %v585, %v1111
        %v1448 = vsel %vm1432, 1, 0
        %v1449 = vsel %vm1433, 1, 0
        %v1450 = vsel %vm1434, 1, 0
        %v1451 = vsel %vm1435, 1, 0
        %v1452 = vsel %vm1436, 1, 0
        %v1453 = vsel %vm1437, 1, 0
        %v1454 = vsel %vm1438, 1, 0
        %v1455 = vsel %vm1439, 1, 0
        %v1456 = vsel %vm1440, 1, 0
        %v1457 = vsel %vm1441, 1, 0
        %v1458 = vsel %vm1442, 1, 0
        %v1459 = vsel %vm1443, 1, 0
        %v1460 = vsel %vm1444, 1, 0
        %v1461 = vsel %vm1445, 1, 0
        %v1462 = vsel %vm1446, 1, 0
        %v1463 = vsel %vm1447, 1, 0
        %v1464 = vadd.s32 %v1416, %v1448
        %v1465 = vadd.s32 %v1417, %v1449
        %v1466 = vadd.s32 %v1418, %v1450
        %v1467 = vadd.s32 %v1419, %v1451
        %v1468 = vadd.s32 %v1420, %v1452
        %v1469 = vadd.s32 %v1421, %v1453
        %v1470 = vadd.s32 %v1422, %v1454
        %v1471 = vadd.s32 %v1423, %v1455
        %v1472 = vadd.s32 %v1424, %v1456
        %v1473 = vadd.s32 %v1425, %v1457
        %v1474 = vadd.s32 %v1426, %v1458
        %v1475 = vadd.s32 %v1427, %v1459
        %v1476 = vadd.s32 %v1428, %v1460
        %v1477 = vadd.s32 %v1429, %v1461
        %v1478 = vadd.s32 %v1430, %v1462
        %v1479 = vadd.s32 %v1431, %v1463
        %v1480 = vld [vmem:[%s197 + $0x2] sm:$0x1]
        %v1481 = vcvt.s32.f32 %v1464
        %v1482 = vcvt.s32.f32 %v1465
        %v1483 = vcvt.s32.f32 %v1466
        %v1484 = vcvt.s32.f32 %v1467
        %v1485 = vcvt.s32.f32 %v1468
        %v1486 = vcvt.s32.f32 %v1469
        %v1487 = vcvt.s32.f32 %v1470
        %v1488 = vcvt.s32.f32 %v1471
        %v1489 = vcvt.s32.f32 %v1472
        %v1490 = vcvt.s32.f32 %v1473
        %v1491 = vcvt.s32.f32 %v1474
        %v1492 = vcvt.s32.f32 %v1475
        %v1493 = vcvt.s32.f32 %v1476
        %v1494 = vcvt.s32.f32 %v1477
        %v1495 = vcvt.s32.f32 %v1478
        %v1496 = vcvt.s32.f32 %v1479
        %1497 = vmatpush.msra.mxu0 %v1496
        %1498 = vmatpush.msra.mxu0 %v1495
        %1499 = vmatpush.msra.mxu0 %v1494
        %1500 = vmatpush.msra.mxu0 %v1493
        %1501 = vmatpush.msra.mxu0 %v1492
        %1502 = vmatpush.msra.mxu0 %v1491
        %1503 = vmatpush.msra.mxu0 %v1490
        %1504 = vmatpush.msra.mxu0 %v1489
        %1505 = vmatpush.msra.mxu0 %v1488
        %1506 = vmatpush.msra.mxu0 %v1487
        %1507 = vmatpush.msra.mxu0 %v1486
        %1508 = vmatpush.msra.mxu0 %v1485
        %1509 = vmatpush.msra.mxu0 %v1484
        %1510 = vmatpush.msra.mxu0 %v1483
        %1511 = vmatpush.msra.mxu0 %v1482
        %1512 = vmatpush.msra.mxu0 %v1481
        %1513 = vmatmul.f32.gmra.mxu0 %v1480
        %v1514 = vpop.f32.mrf.mxu0
        %v1515 = vadd.f32 0.0, %v1514
        %1516 = vdwg.mxu0
        %v1517 = vadd.f32 %v1092, %v1515
        %s1518 = sadd.s32 %s223, 384
        %v1519 = vstv %s1518
        %v1520 = vadd.s32 %v225, %v1519
        %v1521 = vadd.s32 %v226, %v1519
        %v1522 = vadd.s32 %v227, %v1519
        %v1523 = vadd.s32 %v228, %v1519
        %v1524 = vadd.s32 %v229, %v1519
        %v1525 = vadd.s32 %v230, %v1519
        %v1526 = vadd.s32 %v231, %v1519
        %v1527 = vadd.s32 %v232, %v1519
        %v1528 = vadd.s32 %v233, %v1519
        %v1529 = vadd.s32 %v234, %v1519
        %v1530 = vadd.s32 %v235, %v1519
        %v1531 = vadd.s32 %v236, %v1519
        %v1532 = vadd.s32 %v237, %v1519
        %v1533 = vadd.s32 %v238, %v1519
        %v1534 = vadd.s32 %v239, %v1519
        %v1535 = vadd.s32 %v240, %v1519
        %vm1536 = vcmp.eq.s32.totalorder %v258, %v1520
        %vm1537 = vcmp.eq.s32.totalorder %v258, %v1521
        %vm1538 = vcmp.eq.s32.totalorder %v258, %v1522
        %vm1539 = vcmp.eq.s32.totalorder %v258, %v1523
        %vm1540 = vcmp.eq.s32.totalorder %v258, %v1524
        %vm1541 = vcmp.eq.s32.totalorder %v258, %v1525
        %vm1542 = vcmp.eq.s32.totalorder %v258, %v1526
        %vm1543 = vcmp.eq.s32.totalorder %v258, %v1527
        %vm1544 = vcmp.eq.s32.totalorder %v258, %v1528
        %vm1545 = vcmp.eq.s32.totalorder %v258, %v1529
        %vm1546 = vcmp.eq.s32.totalorder %v258, %v1530
        %vm1547 = vcmp.eq.s32.totalorder %v258, %v1531
        %vm1548 = vcmp.eq.s32.totalorder %v258, %v1532
        %vm1549 = vcmp.eq.s32.totalorder %v258, %v1533
        %vm1550 = vcmp.eq.s32.totalorder %v258, %v1534
        %vm1551 = vcmp.eq.s32.totalorder %v258, %v1535
        %v1552 = vsel %vm1536, 1, 0
        %v1553 = vsel %vm1537, 1, 0
        %v1554 = vsel %vm1538, 1, 0
        %v1555 = vsel %vm1539, 1, 0
        %v1556 = vsel %vm1540, 1, 0
        %v1557 = vsel %vm1541, 1, 0
        %v1558 = vsel %vm1542, 1, 0
        %v1559 = vsel %vm1543, 1, 0
        %v1560 = vsel %vm1544, 1, 0
        %v1561 = vsel %vm1545, 1, 0
        %v1562 = vsel %vm1546, 1, 0
        %v1563 = vsel %vm1547, 1, 0
        %v1564 = vsel %vm1548, 1, 0
        %v1565 = vsel %vm1549, 1, 0
        %v1566 = vsel %vm1550, 1, 0
        %v1567 = vsel %vm1551, 1, 0
        %vm1568 = vcmp.eq.s32.totalorder %v291, %v1520
        %vm1569 = vcmp.eq.s32.totalorder %v291, %v1521
        %vm1570 = vcmp.eq.s32.totalorder %v291, %v1522
        %vm1571 = vcmp.eq.s32.totalorder %v291, %v1523
        %vm1572 = vcmp.eq.s32.totalorder %v291, %v1524
        %vm1573 = vcmp.eq.s32.totalorder %v291, %v1525
        %vm1574 = vcmp.eq.s32.totalorder %v291, %v1526
        %vm1575 = vcmp.eq.s32.totalorder %v291, %v1527
        %vm1576 = vcmp.eq.s32.totalorder %v291, %v1528
        %vm1577 = vcmp.eq.s32.totalorder %v291, %v1529
        %vm1578 = vcmp.eq.s32.totalorder %v291, %v1530
        %vm1579 = vcmp.eq.s32.totalorder %v291, %v1531
        %vm1580 = vcmp.eq.s32.totalorder %v291, %v1532
        %vm1581 = vcmp.eq.s32.totalorder %v291, %v1533
        %vm1582 = vcmp.eq.s32.totalorder %v291, %v1534
        %vm1583 = vcmp.eq.s32.totalorder %v291, %v1535
        %v1584 = vsel %vm1568, 1, 0
        %v1585 = vsel %vm1569, 1, 0
        %v1586 = vsel %vm1570, 1, 0
        %v1587 = vsel %vm1571, 1, 0
        %v1588 = vsel %vm1572, 1, 0
        %v1589 = vsel %vm1573, 1, 0
        %v1590 = vsel %vm1574, 1, 0
        %v1591 = vsel %vm1575, 1, 0
        %v1592 = vsel %vm1576, 1, 0
        %v1593 = vsel %vm1577, 1, 0
        %v1594 = vsel %vm1578, 1, 0
        %v1595 = vsel %vm1579, 1, 0
        %v1596 = vsel %vm1580, 1, 0
        %v1597 = vsel %vm1581, 1, 0
        %v1598 = vsel %vm1582, 1, 0
        %v1599 = vsel %vm1583, 1, 0
        %v1600 = vadd.s32 %v1552, %v1584
        %v1601 = vadd.s32 %v1553, %v1585
        %v1602 = vadd.s32 %v1554, %v1586
        %v1603 = vadd.s32 %v1555, %v1587
        %v1604 = vadd.s32 %v1556, %v1588
        %v1605 = vadd.s32 %v1557, %v1589
        %v1606 = vadd.s32 %v1558, %v1590
        %v1607 = vadd.s32 %v1559, %v1591
        %v1608 = vadd.s32 %v1560, %v1592
        %v1609 = vadd.s32 %v1561, %v1593
        %v1610 = vadd.s32 %v1562, %v1594
        %v1611 = vadd.s32 %v1563, %v1595
        %v1612 = vadd.s32 %v1564, %v1596
        %v1613 = vadd.s32 %v1565, %v1597
        %v1614 = vadd.s32 %v1566, %v1598
        %v1615 = vadd.s32 %v1567, %v1599
        %vm1616 = vcmp.eq.s32.totalorder %v340, %v1520
        %vm1617 = vcmp.eq.s32.totalorder %v340, %v1521
        %vm1618 = vcmp.eq.s32.totalorder %v340, %v1522
        %vm1619 = vcmp.eq.s32.totalorder %v340, %v1523
        %vm1620 = vcmp.eq.s32.totalorder %v340, %v1524
        %vm1621 = vcmp.eq.s32.totalorder %v340, %v1525
        %vm1622 = vcmp.eq.s32.totalorder %v340, %v1526
        %vm1623 = vcmp.eq.s32.totalorder %v340, %v1527
        %vm1624 = vcmp.eq.s32.totalorder %v340, %v1528
        %vm1625 = vcmp.eq.s32.totalorder %v340, %v1529
        %vm1626 = vcmp.eq.s32.totalorder %v340, %v1530
        %vm1627 = vcmp.eq.s32.totalorder %v340, %v1531
        %vm1628 = vcmp.eq.s32.totalorder %v340, %v1532
        %vm1629 = vcmp.eq.s32.totalorder %v340, %v1533
        %vm1630 = vcmp.eq.s32.totalorder %v340, %v1534
        %vm1631 = vcmp.eq.s32.totalorder %v340, %v1535
        %v1632 = vsel %vm1616, 1, 0
        %v1633 = vsel %vm1617, 1, 0
        %v1634 = vsel %vm1618, 1, 0
        %v1635 = vsel %vm1619, 1, 0
        %v1636 = vsel %vm1620, 1, 0
        %v1637 = vsel %vm1621, 1, 0
        %v1638 = vsel %vm1622, 1, 0
        %v1639 = vsel %vm1623, 1, 0
        %v1640 = vsel %vm1624, 1, 0
        %v1641 = vsel %vm1625, 1, 0
        %v1642 = vsel %vm1626, 1, 0
        %v1643 = vsel %vm1627, 1, 0
        %v1644 = vsel %vm1628, 1, 0
        %v1645 = vsel %vm1629, 1, 0
        %v1646 = vsel %vm1630, 1, 0
        %v1647 = vsel %vm1631, 1, 0
        %v1648 = vadd.s32 %v1600, %v1632
        %v1649 = vadd.s32 %v1601, %v1633
        %v1650 = vadd.s32 %v1602, %v1634
        %v1651 = vadd.s32 %v1603, %v1635
        %v1652 = vadd.s32 %v1604, %v1636
        %v1653 = vadd.s32 %v1605, %v1637
        %v1654 = vadd.s32 %v1606, %v1638
        %v1655 = vadd.s32 %v1607, %v1639
        %v1656 = vadd.s32 %v1608, %v1640
        %v1657 = vadd.s32 %v1609, %v1641
        %v1658 = vadd.s32 %v1610, %v1642
        %v1659 = vadd.s32 %v1611, %v1643
        %v1660 = vadd.s32 %v1612, %v1644
        %v1661 = vadd.s32 %v1613, %v1645
        %v1662 = vadd.s32 %v1614, %v1646
        %v1663 = vadd.s32 %v1615, %v1647
        %vm1664 = vcmp.eq.s32.totalorder %v389, %v1520
        %vm1665 = vcmp.eq.s32.totalorder %v389, %v1521
        %vm1666 = vcmp.eq.s32.totalorder %v389, %v1522
        %vm1667 = vcmp.eq.s32.totalorder %v389, %v1523
        %vm1668 = vcmp.eq.s32.totalorder %v389, %v1524
        %vm1669 = vcmp.eq.s32.totalorder %v389, %v1525
        %vm1670 = vcmp.eq.s32.totalorder %v389, %v1526
        %vm1671 = vcmp.eq.s32.totalorder %v389, %v1527
        %vm1672 = vcmp.eq.s32.totalorder %v389, %v1528
        %vm1673 = vcmp.eq.s32.totalorder %v389, %v1529
        %vm1674 = vcmp.eq.s32.totalorder %v389, %v1530
        %vm1675 = vcmp.eq.s32.totalorder %v389, %v1531
        %vm1676 = vcmp.eq.s32.totalorder %v389, %v1532
        %vm1677 = vcmp.eq.s32.totalorder %v389, %v1533
        %vm1678 = vcmp.eq.s32.totalorder %v389, %v1534
        %vm1679 = vcmp.eq.s32.totalorder %v389, %v1535
        %v1680 = vsel %vm1664, 1, 0
        %v1681 = vsel %vm1665, 1, 0
        %v1682 = vsel %vm1666, 1, 0
        %v1683 = vsel %vm1667, 1, 0
        %v1684 = vsel %vm1668, 1, 0
        %v1685 = vsel %vm1669, 1, 0
        %v1686 = vsel %vm1670, 1, 0
        %v1687 = vsel %vm1671, 1, 0
        %v1688 = vsel %vm1672, 1, 0
        %v1689 = vsel %vm1673, 1, 0
        %v1690 = vsel %vm1674, 1, 0
        %v1691 = vsel %vm1675, 1, 0
        %v1692 = vsel %vm1676, 1, 0
        %v1693 = vsel %vm1677, 1, 0
        %v1694 = vsel %vm1678, 1, 0
        %v1695 = vsel %vm1679, 1, 0
        %v1696 = vadd.s32 %v1648, %v1680
        %v1697 = vadd.s32 %v1649, %v1681
        %v1698 = vadd.s32 %v1650, %v1682
        %v1699 = vadd.s32 %v1651, %v1683
        %v1700 = vadd.s32 %v1652, %v1684
        %v1701 = vadd.s32 %v1653, %v1685
        %v1702 = vadd.s32 %v1654, %v1686
        %v1703 = vadd.s32 %v1655, %v1687
        %v1704 = vadd.s32 %v1656, %v1688
        %v1705 = vadd.s32 %v1657, %v1689
        %v1706 = vadd.s32 %v1658, %v1690
        %v1707 = vadd.s32 %v1659, %v1691
        %v1708 = vadd.s32 %v1660, %v1692
        %v1709 = vadd.s32 %v1661, %v1693
        %v1710 = vadd.s32 %v1662, %v1694
        %v1711 = vadd.s32 %v1663, %v1695
        %vm1712 = vcmp.eq.s32.totalorder %v438, %v1520
        %vm1713 = vcmp.eq.s32.totalorder %v438, %v1521
        %vm1714 = vcmp.eq.s32.totalorder %v438, %v1522
        %vm1715 = vcmp.eq.s32.totalorder %v438, %v1523
        %vm1716 = vcmp.eq.s32.totalorder %v438, %v1524
        %vm1717 = vcmp.eq.s32.totalorder %v438, %v1525
        %vm1718 = vcmp.eq.s32.totalorder %v438, %v1526
        %vm1719 = vcmp.eq.s32.totalorder %v438, %v1527
        %vm1720 = vcmp.eq.s32.totalorder %v438, %v1528
        %vm1721 = vcmp.eq.s32.totalorder %v438, %v1529
        %vm1722 = vcmp.eq.s32.totalorder %v438, %v1530
        %vm1723 = vcmp.eq.s32.totalorder %v438, %v1531
        %vm1724 = vcmp.eq.s32.totalorder %v438, %v1532
        %vm1725 = vcmp.eq.s32.totalorder %v438, %v1533
        %vm1726 = vcmp.eq.s32.totalorder %v438, %v1534
        %vm1727 = vcmp.eq.s32.totalorder %v438, %v1535
        %v1728 = vsel %vm1712, 1, 0
        %v1729 = vsel %vm1713, 1, 0
        %v1730 = vsel %vm1714, 1, 0
        %v1731 = vsel %vm1715, 1, 0
        %v1732 = vsel %vm1716, 1, 0
        %v1733 = vsel %vm1717, 1, 0
        %v1734 = vsel %vm1718, 1, 0
        %v1735 = vsel %vm1719, 1, 0
        %v1736 = vsel %vm1720, 1, 0
        %v1737 = vsel %vm1721, 1, 0
        %v1738 = vsel %vm1722, 1, 0
        %v1739 = vsel %vm1723, 1, 0
        %v1740 = vsel %vm1724, 1, 0
        %v1741 = vsel %vm1725, 1, 0
        %v1742 = vsel %vm1726, 1, 0
        %v1743 = vsel %vm1727, 1, 0
        %v1744 = vadd.s32 %v1696, %v1728
        %v1745 = vadd.s32 %v1697, %v1729
        %v1746 = vadd.s32 %v1698, %v1730
        %v1747 = vadd.s32 %v1699, %v1731
        %v1748 = vadd.s32 %v1700, %v1732
        %v1749 = vadd.s32 %v1701, %v1733
        %v1750 = vadd.s32 %v1702, %v1734
        %v1751 = vadd.s32 %v1703, %v1735
        %v1752 = vadd.s32 %v1704, %v1736
        %v1753 = vadd.s32 %v1705, %v1737
        %v1754 = vadd.s32 %v1706, %v1738
        %v1755 = vadd.s32 %v1707, %v1739
        %v1756 = vadd.s32 %v1708, %v1740
        %v1757 = vadd.s32 %v1709, %v1741
        %v1758 = vadd.s32 %v1710, %v1742
        %v1759 = vadd.s32 %v1711, %v1743
        %vm1760 = vcmp.eq.s32.totalorder %v487, %v1520
        %vm1761 = vcmp.eq.s32.totalorder %v487, %v1521
        %vm1762 = vcmp.eq.s32.totalorder %v487, %v1522
        %vm1763 = vcmp.eq.s32.totalorder %v487, %v1523
        %vm1764 = vcmp.eq.s32.totalorder %v487, %v1524
        %vm1765 = vcmp.eq.s32.totalorder %v487, %v1525
        %vm1766 = vcmp.eq.s32.totalorder %v487, %v1526
        %vm1767 = vcmp.eq.s32.totalorder %v487, %v1527
        %vm1768 = vcmp.eq.s32.totalorder %v487, %v1528
        %vm1769 = vcmp.eq.s32.totalorder %v487, %v1529
        %vm1770 = vcmp.eq.s32.totalorder %v487, %v1530
        %vm1771 = vcmp.eq.s32.totalorder %v487, %v1531
        %vm1772 = vcmp.eq.s32.totalorder %v487, %v1532
        %vm1773 = vcmp.eq.s32.totalorder %v487, %v1533
        %vm1774 = vcmp.eq.s32.totalorder %v487, %v1534
        %vm1775 = vcmp.eq.s32.totalorder %v487, %v1535
        %v1776 = vsel %vm1760, 1, 0
        %v1777 = vsel %vm1761, 1, 0
        %v1778 = vsel %vm1762, 1, 0
        %v1779 = vsel %vm1763, 1, 0
        %v1780 = vsel %vm1764, 1, 0
        %v1781 = vsel %vm1765, 1, 0
        %v1782 = vsel %vm1766, 1, 0
        %v1783 = vsel %vm1767, 1, 0
        %v1784 = vsel %vm1768, 1, 0
        %v1785 = vsel %vm1769, 1, 0
        %v1786 = vsel %vm1770, 1, 0
        %v1787 = vsel %vm1771, 1, 0
        %v1788 = vsel %vm1772, 1, 0
        %v1789 = vsel %vm1773, 1, 0
        %v1790 = vsel %vm1774, 1, 0
        %v1791 = vsel %vm1775, 1, 0
        %v1792 = vadd.s32 %v1744, %v1776
        %v1793 = vadd.s32 %v1745, %v1777
        %v1794 = vadd.s32 %v1746, %v1778
        %v1795 = vadd.s32 %v1747, %v1779
        %v1796 = vadd.s32 %v1748, %v1780
        %v1797 = vadd.s32 %v1749, %v1781
        %v1798 = vadd.s32 %v1750, %v1782
        %v1799 = vadd.s32 %v1751, %v1783
        %v1800 = vadd.s32 %v1752, %v1784
        %v1801 = vadd.s32 %v1753, %v1785
        %v1802 = vadd.s32 %v1754, %v1786
        %v1803 = vadd.s32 %v1755, %v1787
        %v1804 = vadd.s32 %v1756, %v1788
        %v1805 = vadd.s32 %v1757, %v1789
        %v1806 = vadd.s32 %v1758, %v1790
        %v1807 = vadd.s32 %v1759, %v1791
        %vm1808 = vcmp.eq.s32.totalorder %v536, %v1520
        %vm1809 = vcmp.eq.s32.totalorder %v536, %v1521
        %vm1810 = vcmp.eq.s32.totalorder %v536, %v1522
        %vm1811 = vcmp.eq.s32.totalorder %v536, %v1523
        %vm1812 = vcmp.eq.s32.totalorder %v536, %v1524
        %vm1813 = vcmp.eq.s32.totalorder %v536, %v1525
        %vm1814 = vcmp.eq.s32.totalorder %v536, %v1526
        %vm1815 = vcmp.eq.s32.totalorder %v536, %v1527
        %vm1816 = vcmp.eq.s32.totalorder %v536, %v1528
        %vm1817 = vcmp.eq.s32.totalorder %v536, %v1529
        %vm1818 = vcmp.eq.s32.totalorder %v536, %v1530
        %vm1819 = vcmp.eq.s32.totalorder %v536, %v1531
        %vm1820 = vcmp.eq.s32.totalorder %v536, %v1532
        %vm1821 = vcmp.eq.s32.totalorder %v536, %v1533
        %vm1822 = vcmp.eq.s32.totalorder %v536, %v1534
        %vm1823 = vcmp.eq.s32.totalorder %v536, %v1535
        %v1824 = vsel %vm1808, 1, 0
        %v1825 = vsel %vm1809, 1, 0
        %v1826 = vsel %vm1810, 1, 0
        %v1827 = vsel %vm1811, 1, 0
        %v1828 = vsel %vm1812, 1, 0
        %v1829 = vsel %vm1813, 1, 0
        %v1830 = vsel %vm1814, 1, 0
        %v1831 = vsel %vm1815, 1, 0
        %v1832 = vsel %vm1816, 1, 0
        %v1833 = vsel %vm1817, 1, 0
        %v1834 = vsel %vm1818, 1, 0
        %v1835 = vsel %vm1819, 1, 0
        %v1836 = vsel %vm1820, 1, 0
        %v1837 = vsel %vm1821, 1, 0
        %v1838 = vsel %vm1822, 1, 0
        %v1839 = vsel %vm1823, 1, 0
        %v1840 = vadd.s32 %v1792, %v1824
        %v1841 = vadd.s32 %v1793, %v1825
        %v1842 = vadd.s32 %v1794, %v1826
        %v1843 = vadd.s32 %v1795, %v1827
        %v1844 = vadd.s32 %v1796, %v1828
        %v1845 = vadd.s32 %v1797, %v1829
        %v1846 = vadd.s32 %v1798, %v1830
        %v1847 = vadd.s32 %v1799, %v1831
        %v1848 = vadd.s32 %v1800, %v1832
        %v1849 = vadd.s32 %v1801, %v1833
        %v1850 = vadd.s32 %v1802, %v1834
        %v1851 = vadd.s32 %v1803, %v1835
        %v1852 = vadd.s32 %v1804, %v1836
        %v1853 = vadd.s32 %v1805, %v1837
        %v1854 = vadd.s32 %v1806, %v1838
        %v1855 = vadd.s32 %v1807, %v1839
        %vm1856 = vcmp.eq.s32.totalorder %v585, %v1520
        %vm1857 = vcmp.eq.s32.totalorder %v585, %v1521
        %vm1858 = vcmp.eq.s32.totalorder %v585, %v1522
        %vm1859 = vcmp.eq.s32.totalorder %v585, %v1523
        %vm1860 = vcmp.eq.s32.totalorder %v585, %v1524
        %vm1861 = vcmp.eq.s32.totalorder %v585, %v1525
        %vm1862 = vcmp.eq.s32.totalorder %v585, %v1526
        %vm1863 = vcmp.eq.s32.totalorder %v585, %v1527
        %vm1864 = vcmp.eq.s32.totalorder %v585, %v1528
        %vm1865 = vcmp.eq.s32.totalorder %v585, %v1529
        %vm1866 = vcmp.eq.s32.totalorder %v585, %v1530
        %vm1867 = vcmp.eq.s32.totalorder %v585, %v1531
        %vm1868 = vcmp.eq.s32.totalorder %v585, %v1532
        %vm1869 = vcmp.eq.s32.totalorder %v585, %v1533
        %vm1870 = vcmp.eq.s32.totalorder %v585, %v1534
        %vm1871 = vcmp.eq.s32.totalorder %v585, %v1535
        %v1872 = vsel %vm1856, 1, 0
        %v1873 = vsel %vm1857, 1, 0
        %v1874 = vsel %vm1858, 1, 0
        %v1875 = vsel %vm1859, 1, 0
        %v1876 = vsel %vm1860, 1, 0
        %v1877 = vsel %vm1861, 1, 0
        %v1878 = vsel %vm1862, 1, 0
        %v1879 = vsel %vm1863, 1, 0
        %v1880 = vsel %vm1864, 1, 0
        %v1881 = vsel %vm1865, 1, 0
        %v1882 = vsel %vm1866, 1, 0
        %v1883 = vsel %vm1867, 1, 0
        %v1884 = vsel %vm1868, 1, 0
        %v1885 = vsel %vm1869, 1, 0
        %v1886 = vsel %vm1870, 1, 0
        %v1887 = vsel %vm1871, 1, 0
        %v1888 = vadd.s32 %v1840, %v1872
        %v1889 = vadd.s32 %v1841, %v1873
        %v1890 = vadd.s32 %v1842, %v1874
        %v1891 = vadd.s32 %v1843, %v1875
        %v1892 = vadd.s32 %v1844, %v1876
        %v1893 = vadd.s32 %v1845, %v1877
        %v1894 = vadd.s32 %v1846, %v1878
        %v1895 = vadd.s32 %v1847, %v1879
        %v1896 = vadd.s32 %v1848, %v1880
        %v1897 = vadd.s32 %v1849, %v1881
        %v1898 = vadd.s32 %v1850, %v1882
        %v1899 = vadd.s32 %v1851, %v1883
        %v1900 = vadd.s32 %v1852, %v1884
        %v1901 = vadd.s32 %v1853, %v1885
        %v1902 = vadd.s32 %v1854, %v1886
        %v1903 = vadd.s32 %v1855, %v1887
        %v1904 = vld [vmem:[%s197 + $0x3] sm:$0x1]
        %v1905 = vcvt.s32.f32 %v1888
        %v1906 = vcvt.s32.f32 %v1889
        %v1907 = vcvt.s32.f32 %v1890
        %v1908 = vcvt.s32.f32 %v1891
        %v1909 = vcvt.s32.f32 %v1892
        %v1910 = vcvt.s32.f32 %v1893
        %v1911 = vcvt.s32.f32 %v1894
        %v1912 = vcvt.s32.f32 %v1895
        %v1913 = vcvt.s32.f32 %v1896
        %v1914 = vcvt.s32.f32 %v1897
        %v1915 = vcvt.s32.f32 %v1898
        %v1916 = vcvt.s32.f32 %v1899
        %v1917 = vcvt.s32.f32 %v1900
        %v1918 = vcvt.s32.f32 %v1901
        %v1919 = vcvt.s32.f32 %v1902
        %v1920 = vcvt.s32.f32 %v1903
        %1921 = vmatpush.msra.mxu0 %v1920
        %1922 = vmatpush.msra.mxu0 %v1919
        %1923 = vmatpush.msra.mxu0 %v1918
        %1924 = vmatpush.msra.mxu0 %v1917
        %1925 = vmatpush.msra.mxu0 %v1916
        %1926 = vmatpush.msra.mxu0 %v1915
        %1927 = vmatpush.msra.mxu0 %v1914
        %1928 = vmatpush.msra.mxu0 %v1913
        %1929 = vmatpush.msra.mxu0 %v1912
        %1930 = vmatpush.msra.mxu0 %v1911
        %1931 = vmatpush.msra.mxu0 %v1910
        %1932 = vmatpush.msra.mxu0 %v1909
        %1933 = vmatpush.msra.mxu0 %v1908
        %1934 = vmatpush.msra.mxu0 %v1907
        %1935 = vmatpush.msra.mxu0 %v1906
        %1936 = vmatpush.msra.mxu0 %v1905
        %1937 = vmatmul.f32.gmra.mxu0 %v1904
        %v1938 = vpop.f32.mrf.mxu0
        %v1939 = vadd.f32 0.0, %v1938
        %1940 = vdwg.mxu0
        %v1941 = vadd.f32 %v1517, %v1939
        %v1942 = vld [vmem:[#allocation8] sm:$0x1]
        %v1943 = vadd.f32 %v1942, %v1941
        %1944 = vst [vmem:[#allocation8] sm:$0x1] %v1943
        %p1945 = scmp.eq.s32.totalorder %s25, 1
        // Predicated region
        $region45: #{tpu_custom_call.1} parent=31 // pred_check
          %p1946 = pneg %p1945
        $region46: #{tpu_custom_call.1} parent=31 // pred_check_branch
          %1948 = sbr.rel (%p1946) target = $region48
        $region47: #{tpu_custom_call.1} parent=31 // pred_region
          %v1949 = vld [vmem:[#allocation8] sm:$0x1]
          %v1950 = vmul.f32 %v1949, 0.125
          %s1951 = sld [smem:[#allocation2]]
          %v1952 = vstv %s1951
          %v1953 = vadd.f32 %v1950, %v1952
          %v1954 = vxor.u32 %v1953, 2147483648
          %v1955 = vmul.f32 %v1954, 1.442695
          %v1956 = vpow.pop %v1955
          %v1957 = vadd.f32 %v1956, 1.0
          %v1958 = vrcp.pop %v1957
          %v1959 = vmul.f32 %v1957, %v1958
          %v1960 = vsub.f32 1.0, %v1959
          %v1961 = vmul.f32 %v1958, %v1960
          %v1962 = vadd.f32 %v1958, %v1961
          %vm1963 = vweird.f32 %v1957
          %vm1964 = vweird.f32 %v1958
          %vm1965 = vmor %vm1963, %vm1964
          %v1966 = vsel %vm1965, %v1958, %v1962
          %v1967 = vand.u32 2147483647, %v1957
          %vm1968 = vcmp.eq.f32.partialorder %v1967, 8.507059e+37
          %v1969 = vand.u32 %v1957, 2147483648
          %v1970 = vor.u32 1.1754944e-38, %v1969
          %v1971 = vsel %vm1968, %v1970, %v1966
          %v1972 = vmul.f32 1.0, %v1971
          %1973 = vst [vmem:[#allocation8] sm:$0x1] %v1972
        $region48: #{tpu_custom_call.1} parent=31 // pred_fallthru
          _
        // Predicated region
        $region49: #{tpu_custom_call.1} parent=31 // pred_check
          %p1974 = pneg %p123
        $region50: #{tpu_custom_call.1} parent=31 // pred_check_branch
          %1976 = sbr.rel (%p1974) target = $region52
        $region51: #{tpu_custom_call.1} parent=31 // pred_region
          %1978 = vsyncadd [#allocation5], 0
          %s1979 = scalar_lea.hbm %s3, %s24
          %s1981 = sshll.u32 [#allocation8], 4
          %s1982 = int_to_ptr.vmem [resolvable:$true] %s1981
          %s1983 = sshll.u32 %s1979, 4
          %s1984 = int_to_ptr.hbm [resolvable:$true] %s1983
          %1986 = dma.vmem_to_hbm [thread:$0]  %s1982, 16, %s1984, [#allocation5]
        $region52: #{tpu_custom_call.1} parent=31 // pred_fallthru
          _
        // Predicated region
        $region53: #{tpu_custom_call.1} parent=31 // pred_check
          %p1987 = pneg %p123
        $region54: #{tpu_custom_call.1} parent=31 // pred_check_branch
          %1989 = sbr.rel (%p1987) target = $region56
        $region55: #{tpu_custom_call.1} parent=31 // pred_region
          %1991 = dma.done [#allocation5], 16
        $region56: #{tpu_custom_call.1} parent=31 // pred_fallthru
          _
      $region32: #{tpu_custom_call.1} parent=5 // pred_fallthru
        _
      %p1992 = scmp.le.s32.totalorder 2, %s15
      // Predicated region
      $region57: #{tpu_custom_call.1} parent=5 // pred_check
        %p1993 = pneg %p1992
      $region58: #{tpu_custom_call.1} parent=5 // pred_check_branch
        %1995 = sbr.rel (%p1993) target = $region60
      $region59: #{tpu_custom_call.1} parent=5 // pred_region
        %s1996 = ssub.s32 %s15, 2
      $region60: #{tpu_custom_call.1} parent=5 // pred_fallthru
        _
    $region6: #{tpu_custom_call.1} parent=1 // loop_footer
      %s19 = sadd.s32 1, %s15
    $region7: #{tpu_custom_call.1} parent=1 // loop_footer_branch
      %14 = sbr.rel target = $region3
    $region8: #{tpu_custom_call.1} parent=1 // loop_exit
      _
    %1997 = vsyncpa [#allocation4], 1
    %s1998 = scalar_lea.sflag [#allocation4], 1
    %1999 = vsyncpa %s1998, 1
    %2000 = vsyncpa [#allocation7], 1
    %s2001 = scalar_lea.sflag [#allocation7], 1
    %2002 = vsyncpa %s2001, 1
    %2003 = vsyncpa [#allocation5], 1
    %s2004 = scalar_lea.sflag [#allocation5], 1
    %2005 = vsyncpa %s2004, 1

</llo_original>
